<compile_context>
chip_gen: v7x
topology: tpu7x:2x2x1
jax: 0.10.0
libtpu: 0.0.40
codegen_flags: <defaults>
</compile_context>

<pallas_src>
import math
from functools import partial

import jax
import jax.numpy as jnp
from jax.experimental import pallas as pl
from jax.experimental.pallas import tpu as pltpu

_SELU_ALPHA = 1.6732632423543772848170429916717
_SELU_SCALE = 1.0507009873554804934193349852946
_LN_EPS = 1e-5


def _selu_f32(y):
    # exp on min(y, 0): the unselected branch can never produce inf.
    neg = _SELU_ALPHA * (jnp.exp(jnp.minimum(y, 0.0)) - 1.0)
    return _SELU_SCALE * jnp.where(y > 0.0, y, neg)


# ---------------------------------------------------------------------------
# Fused kernel: W @ patches^T + b -> SELU -> LayerNorm((C,H,W)) -> affine.
# One grid step == one batch sample; the whole (C_out, H*W) activation tile
# lives in VMEM, so the LayerNorm statistics are a free in-kernel reduction.
# ---------------------------------------------------------------------------
def _primary_caps_kernel(a_ref, w_ref, bias_ref, gamma_ref, beta_ref, o_ref):
    # bf16 operands, f32 accumulation on the MXU: (C_out, K) @ (K, M) -> (C_out, M).
    y = jnp.dot(w_ref[...], a_ref[...], preferred_element_type=jnp.float32)
    y = y + bias_ref[...]                       # (C_out, 1) broadcasts over positions
    y = _selu_f32(y)

    # LayerNorm over (C_out, H, W) of this sample == over the whole (C_out, M) tile.
    n = y.shape[0] * y.shape[1]
    mu = jnp.sum(jnp.sum(y, axis=1, keepdims=True), axis=0, keepdims=True) * (1.0 / n)
    d = y - mu
    var = jnp.sum(jnp.sum(d * d, axis=1, keepdims=True), axis=0, keepdims=True) * (1.0 / n)
    inv = jax.lax.rsqrt(var + _LN_EPS)          # fused rsqrt instead of sqrt + divide
    o_ref[...] = d * inv * gamma_ref[...] + beta_ref[...]


def _build_patches_t(x, kh, kw, pad):
    """NCHW f32 -> bf16 im2col^T (B, C*kh*kw, Ho*Wo); K ordered (c, kh, kw)."""
    # TODO(synk): fold this gather into the kernel as an implicit GEMM (loop over the
    # 9 taps on shifted VMEM windows) to remove the kh*kw HBM read amplification.
    B, C, H, W = x.shape
    xp = jnp.pad(x.astype(jnp.bfloat16), ((0, 0), (0, 0), (pad, pad), (pad, pad)))
    Ho = H + 2 * pad - kh + 1
    Wo = W + 2 * pad - kw + 1
    taps = [xp[:, :, i:i + Ho, j:j + Wo].reshape(B, C, 1, Ho * Wo)
            for i in range(kh) for j in range(kw)]
    pt = jnp.concatenate(taps, axis=2)          # (B, C, kh*kw, Ho*Wo)
    return pt.reshape(B, C * kh * kw, Ho * Wo), Ho, Wo


def primary_capsules_forward(x, params, num_capsules, out_dim):
    """PrimaryCapsules.forward: x (B, C_in, H, W) -> (B, num_capsules, out_dim, H, W)."""
    w, b = params["w"], params["b"]
    gamma, beta = params["ln_g"], params["ln_b"]
    B, C_in, H, W = x.shape
    C_out, _, kh, kw = w.shape
    assert C_out == num_capsules * out_dim

    patches_t, Ho, Wo = _build_patches_t(x, kh, kw, pad=1)       # (B, K, H*W) bf16
    assert (Ho, Wo) == (H, W)
    M = H * W
    K = C_in * kh * kw

    # Natural layouts -> no host-side transposes, only reshapes/casts.
    wmat = w.reshape(C_out, K).astype(jnp.bfloat16)              # K ordered (c, kh, kw)
    bias = b.reshape(C_out, 1).astype(jnp.float32)
    gamma_m = gamma.reshape(C_out, M).astype(jnp.float32)
    beta_m = beta.reshape(C_out, M).astype(jnp.float32)

    out = pl.pallas_call(
        _primary_caps_kernel,
        out_shape=jax.ShapeDtypeStruct((B, C_out, M), jnp.float32),
        grid=(B,),
        in_specs=[
            pl.BlockSpec((None, K, M), lambda bi: (bi, 0, 0)),   # per-sample patches^T
            pl.BlockSpec((C_out, K), lambda bi: (0, 0)),         # weights (VMEM-resident)
            pl.BlockSpec((C_out, 1), lambda bi: (0, 0)),         # bias
            pl.BlockSpec((C_out, M), lambda bi: (0, 0)),         # LayerNorm gamma
            pl.BlockSpec((C_out, M), lambda bi: (0, 0)),         # LayerNorm beta
        ],
        out_specs=pl.BlockSpec((None, C_out, M), lambda bi: (bi, 0, 0)),
        compiler_params=pltpu.CompilerParams(dimension_semantics=("parallel",)),
    )(patches_t, wmat, bias, gamma_m, beta_m)

    # (B, C_out, H*W) is already contiguous in torch's (B, C, H, W) order:
    # the capsule view is a pure metadata reshape.
    return out.reshape(B, num_capsules, out_dim, H, W)


# ---------------------------------------------------------------------------
# Pure-JAX reference (same bf16 quantization of the MXU operands) for checking.
# ---------------------------------------------------------------------------
def _ref_forward(x, params, num_capsules, out_dim):
    xq = x.astype(jnp.bfloat16).astype(jnp.float32)
    wq = params["w"].astype(jnp.bfloat16).astype(jnp.float32)
    y = jax.lax.conv_general_dilated(
        xq, wq, window_strides=(1, 1), padding=((1, 1), (1, 1)),
        dimension_numbers=("NCHW", "OIHW", "NCHW"),
        precision=jax.lax.Precision.HIGHEST)
    y = y + params["b"][None, :, None, None]
    y = _selu_f32(y)
    mu = y.mean(axis=(1, 2, 3), keepdims=True)
    var = y.var(axis=(1, 2, 3), keepdims=True)
    y = (y - mu) / jnp.sqrt(var + _LN_EPS) * params["ln_g"][None] + params["ln_b"][None]
    B, C, H, W = y.shape
    return y.reshape(B, num_capsules, out_dim, H, W)


def init_params(key, in_channels, num_capsules, out_dim, H, W):
    C_out = num_capsules * out_dim
    k1, k2, k3, k4 = jax.random.split(key, 4)
    fan = in_channels * 9
    w = jax.random.normal(k1, (C_out, in_channels, 3, 3), jnp.float32) / math.sqrt(fan)
    b = 0.01 * jax.random.normal(k2, (C_out,), jnp.float32)
    g = 1.0 + 0.05 * jax.random.normal(k3, (C_out, H, W), jnp.float32)
    be = 0.05 * jax.random.normal(k4, (C_out, H, W), jnp.float32)
    return {"w": w, "b": b, "ln_g": g, "ln_b": be}


if __name__ == "__main__":
    # Small shapes consistent with the module; C_out = 16*8 = 128.
    B, C_in, H, W = 2, 32, 16, 16
    num_capsules, out_dim = 16, 8

    key = jax.random.PRNGKey(0)
    kx, kp = jax.random.split(key)
    x = jax.random.normal(kx, (B, C_in, H, W), jnp.float32)
    params = init_params(kp, C_in, num_capsules, out_dim, H, W)

    fwd = jax.jit(partial(primary_capsules_forward,
                          num_capsules=num_capsules, out_dim=out_dim))
    caps = fwd(x, params)
    jax.block_until_ready(caps)

    assert caps.shape == (B, num_capsules, out_dim, H, W)
    assert bool(jnp.all(jnp.isfinite(caps)))

    ref = _ref_forward(x, params, num_capsules, out_dim)
    max_err = float(jnp.max(jnp.abs(caps - ref)))
    assert max_err < 1e-2, f"max abs err {max_err}"

    print("KERNEL_OK")
</pallas_src>

<mosaic_0001>
module attributes {stable_mosaic.version = 11 : i64} {
  func.func @_primary_caps_kernel(%arg0: i32, %arg1: memref<1x288x256xbf16, #tpu.memory_space<vmem>>, %arg2: memref<128x288xbf16, #tpu.memory_space<vmem>>, %arg3: memref<128x1xf32, #tpu.memory_space<vmem>>, %arg4: memref<128x256xf32, #tpu.memory_space<vmem>>, %arg5: memref<128x256xf32, #tpu.memory_space<vmem>>, %arg6: memref<1x128x256xf32, #tpu.memory_space<vmem>>) attributes {dimension_semantics = [#tpu.dimension_semantics<parallel>], iteration_bounds = array<i64: 2>, scalar_prefetch = 0 : i64, scratch_operands = 0 : i64, tpu.core_type = #tpu.core_type<tc>, window_params = [{transform_indices = @transform_0, window_bounds = array<i64: 1, 288, 256>}, {pipeline_mode = #tpu.pipeline_mode<synchronous>, transform_indices = @transform_1, window_bounds = array<i64: 128, 288>}, {pipeline_mode = #tpu.pipeline_mode<synchronous>, transform_indices = @transform_2, window_bounds = array<i64: 128, 1>}, {pipeline_mode = #tpu.pipeline_mode<synchronous>, transform_indices = @transform_3, window_bounds = array<i64: 128, 256>}, {pipeline_mode = #tpu.pipeline_mode<synchronous>, transform_indices = @transform_4, window_bounds = array<i64: 128, 256>}, {transform_indices = @transform_5, window_bounds = array<i64: 1, 128, 256>}]} {
    %c0 = arith.constant 0 : index
    %c0_0 = arith.constant 0 : index
    %0 = vector.load %arg2[%c0, %c0_0] : memref<128x288xbf16, #tpu.memory_space<vmem>>, vector<128x288xbf16>
    %c0_1 = arith.constant 0 : index
    %c0_2 = arith.constant 0 : index
    %c0_3 = arith.constant 0 : index
    %1 = vector.load %arg1[%c0_1, %c0_2, %c0_3] : memref<1x288x256xbf16, #tpu.memory_space<vmem>>, vector<1x288x256xbf16>
    %2 = vector.shape_cast %1 : vector<1x288x256xbf16> to vector<288x256xbf16>
    %cst = arith.constant dense<0.000000e+00> : vector<128x256xf32>
    %3 = tpu.matmul %0, %2, %cst {dimension_numbers = #tpu.dot_dimension_numbers<[1], [0], [0], [1], [0, 0, 1, 1], [], []>} : vector<128x288xbf16>, vector<288x256xbf16>, vector<128x256xf32> -> vector<128x256xf32>
    %c0_4 = arith.constant 0 : index
    %c0_5 = arith.constant 0 : index
    %4 = vector.load %arg3[%c0_4, %c0_5] : memref<128x1xf32, #tpu.memory_space<vmem>>, vector<128x1xf32>
    %5 = vector.broadcast %4 : vector<128x1xf32> to vector<128x256xf32>
    %6 = arith.addf %3, %5 : vector<128x256xf32>
    %cst_6 = arith.constant 0.000000e+00 : f32
    %7 = vector.broadcast %cst_6 : f32 to vector<128x256xf32>
    %8 = arith.minimumf %6, %7 : vector<128x256xf32>
    %9 = math.exp %8 : vector<128x256xf32>
    %cst_7 = arith.constant 1.000000e+00 : f32
    %10 = vector.broadcast %cst_7 : f32 to vector<128x256xf32>
    %11 = arith.subf %9, %10 : vector<128x256xf32>
    %cst_8 = arith.constant 1.67326319 : f32
    %12 = vector.broadcast %cst_8 : f32 to vector<128x256xf32>
    %13 = arith.mulf %12, %11 : vector<128x256xf32>
    %cst_9 = arith.constant 0.000000e+00 : f32
    %14 = vector.broadcast %cst_9 : f32 to vector<128x256xf32>
    %15 = arith.cmpf ogt, %6, %14 : vector<128x256xf32>
    %16 = arith.select %15, %6, %13 : vector<128x256xi1>, vector<128x256xf32>
    %cst_10 = arith.constant 1.05070102 : f32
    %17 = vector.broadcast %cst_10 : f32 to vector<128x256xf32>
    %18 = arith.mulf %17, %16 : vector<128x256xf32>
    %cst_11 = arith.constant dense<0.000000e+00> : vector<128xf32>
    %19 = vector.multi_reduction <add>, %18, %cst_11 [1] : vector<128x256xf32> to vector<128xf32>
    %20 = vector.shape_cast %19 : vector<128xf32> to vector<128x1xf32>
    %cst_12 = arith.constant dense<0.000000e+00> : vector<1xf32>
    %21 = vector.multi_reduction <add>, %20, %cst_12 [0] : vector<128x1xf32> to vector<1xf32>
    %22 = vector.shape_cast %21 : vector<1xf32> to vector<1x1xf32>
    %cst_13 = arith.constant 3.05175781E-5 : f32
    %23 = vector.broadcast %cst_13 : f32 to vector<1x1xf32>
    %24 = arith.mulf %22, %23 : vector<1x1xf32>
    %25 = vector.broadcast %24 : vector<1x1xf32> to vector<128x256xf32>
    %26 = arith.subf %18, %25 : vector<128x256xf32>
    %27 = arith.mulf %26, %26 : vector<128x256xf32>
    %cst_14 = arith.constant dense<0.000000e+00> : vector<128xf32>
    %28 = vector.multi_reduction <add>, %27, %cst_14 [1] : vector<128x256xf32> to vector<128xf32>
    %29 = vector.shape_cast %28 : vector<128xf32> to vector<128x1xf32>
    %cst_15 = arith.constant dense<0.000000e+00> : vector<1xf32>
    %30 = vector.multi_reduction <add>, %29, %cst_15 [0] : vector<128x1xf32> to vector<1xf32>
    %31 = vector.shape_cast %30 : vector<1xf32> to vector<1x1xf32>
    %cst_16 = arith.constant 3.05175781E-5 : f32
    %32 = vector.broadcast %cst_16 : f32 to vector<1x1xf32>
    %33 = arith.mulf %31, %32 : vector<1x1xf32>
    %cst_17 = arith.constant 9.99999974E-6 : f32
    %34 = vector.broadcast %cst_17 : f32 to vector<1x1xf32>
    %35 = arith.addf %33, %34 : vector<1x1xf32>
    %36 = math.rsqrt %35 : vector<1x1xf32>
    %37 = vector.broadcast %36 : vector<1x1xf32> to vector<128x256xf32>
    %38 = arith.mulf %26, %37 : vector<128x256xf32>
    %c0_18 = arith.constant 0 : index
    %c0_19 = arith.constant 0 : index
    %39 = vector.load %arg4[%c0_18, %c0_19] : memref<128x256xf32, #tpu.memory_space<vmem>>, vector<128x256xf32>
    %40 = arith.mulf %38, %39 : vector<128x256xf32>
    %c0_20 = arith.constant 0 : index
    %c0_21 = arith.constant 0 : index
    %41 = vector.load %arg5[%c0_20, %c0_21] : memref<128x256xf32, #tpu.memory_space<vmem>>, vector<128x256xf32>
    %42 = arith.addf %40, %41 : vector<128x256xf32>
    %c0_22 = arith.constant 0 : index
    %c0_23 = arith.constant 0 : index
    %c0_24 = arith.constant 0 : index
    %43 = vector.load %arg6[%c0_22, %c0_23, %c0_24] : memref<1x128x256xf32, #tpu.memory_space<vmem>>, vector<1x128x256xf32>
    %44 = vector.shape_cast %43 : vector<1x128x256xf32> to vector<128x256xf32>
    %45 = vector.shape_cast %42 : vector<128x256xf32> to vector<1x128x256xf32>
    tpu.vector_store %arg6[%c0_22, %c0_23, %c0_24], %45 {strides = array<i32>} : memref<1x128x256xf32, #tpu.memory_space<vmem>>, vector<1x128x256xf32>,
    return
  }
  func.func @transform_0(%arg0: i32) -> (i32, i32, i32) {
    %c0_i32 = arith.constant 0 : i32
    %c0_i32_0 = arith.constant 0 : i32
    %c0_i32_1 = arith.constant 0 : i32
    return %arg0, %c0_i32, %c0_i32_0 : i32, i32, i32
  }
  func.func @transform_1(%arg0: i32) -> (i32, i32) {
    %c0_i32 = arith.constant 0 : i32
    %c0_i32_0 = arith.constant 0 : i32
    %c0_i32_1 = arith.constant 0 : i32
    return %c0_i32, %c0_i32_0 : i32, i32
  }
  func.func @transform_2(%arg0: i32) -> (i32, i32) {
    %c0_i32 = arith.constant 0 : i32
    %c0_i32_0 = arith.constant 0 : i32
    %c0_i32_1 = arith.constant 0 : i32
    return %c0_i32, %c0_i32_0 : i32, i32
  }
  func.func @transform_3(%arg0: i32) -> (i32, i32) {
    %c0_i32 = arith.constant 0 : i32
    %c0_i32_0 = arith.constant 0 : i32
    %c0_i32_1 = arith.constant 0 : i32
    return %c0_i32, %c0_i32_0 : i32, i32
  }
  func.func @transform_4(%arg0: i32) -> (i32, i32) {
    %c0_i32 = arith.constant 0 : i32
    %c0_i32_0 = arith.constant 0 : i32
    %c0_i32_1 = arith.constant 0 : i32
    return %c0_i32, %c0_i32_0 : i32, i32
  }
  func.func @transform_5(%arg0: i32) -> (i32, i32, i32) {
    %c0_i32 = arith.constant 0 : i32
    %c0_i32_0 = arith.constant 0 : i32
    %c0_i32_1 = arith.constant 0 : i32
    return %arg0, %c0_i32, %c0_i32_0 : i32, i32, i32
  }
}

</mosaic_0001>

<llo_original>
// kernel: primary_capsules_forward.1
$region0: #{primary_capsules_forward.1}
  #allocation0 [shape = 'u32[]', space=smem, size = 0x4, offset = 0x4, fixed_abs, tag = 'smem constant byte address 0x4 - core index']
  #allocation1 [shape = 'u32[144,128]{1,0:T(1,128)}', space=vmem, size = 0x12000, scoped, tag = 'internal scratch']
  %s0 = inlined_call_operand.vmem [shape: bf16[2,288,256], index: 0, kind: input, shape index: {}]
  %s1 = inlined_call_operand.vmem [shape: bf16[128,288], index: 1, kind: input, shape index: {}]
  %s2 = inlined_call_operand.vmem [shape: f32[128,1], index: 2, kind: input, shape index: {}]
  %s3 = inlined_call_operand.vmem [shape: f32[128,256], index: 3, kind: input, shape index: {}]
  %s4 = inlined_call_operand.vmem [shape: f32[128,256], index: 4, kind: input, shape index: {}]
  %s5 = inlined_call_operand.vmem [shape: f32[2,128,256], index: 5, kind: output, shape index: {}]
  %s6 = sld [smem:[#allocation0]]
  $region53: #{primary_capsules_forward.1} parent=0
    _
  %s8 = ssub.s32 1, %s6
  %s9 = scalar_select 0, %s8, %s6
  loop: start=0, step=1, limit=4
  $region2: #{primary_capsules_forward.1} parent=0 // loop_pre_header
    _
  $region3: #{primary_capsules_forward.1} parent=0 // loop_header
    %s11 = sphi 0, %s15
    %p12 = scmp.ge.s32.totalorder %s11, 4
    %s21 = sphi 0, %s23
    %s24 = sphi 0, %s21
    %s25 = sphi 0, %s24
    %s41 = sphi 0, %s25
    %s45 = sphi 0, %s45
    %s47 = sphi 0, %s45
    %s48 = sphi 0, %s47
    %s62 = sphi 0, %s48
    %s66 = sphi 0, %s66
    %s68 = sphi 0, %s66
    %s69 = sphi 0, %s68
    %s83 = sphi 0, %s69
    %s87 = sphi 0, %s87
    %s89 = sphi 0, %s87
    %s90 = sphi 0, %s89
    %s104 = sphi 0, %s90
    %s108 = sphi 0, %s108
    %s110 = sphi 0, %s108
    %s111 = sphi 0, %s110
    %s125 = sphi 0, %s111
    %s131 = sphi 0, %s133
    %s134 = sphi 0, %s131
    %s135 = sphi 0, %s134
    %s151 = sphi 0, %s135
  $region4: #{primary_capsules_forward.1} parent=0 // loop_header_branch
    %14 = sbr.rel (%p12) target = $region8
  $region5: #{primary_capsules_forward.1} parent=0 // loop_body
    %s16 = ssub.s32 %s11, 1
    %s17 = ssub.s32 %s11, 2
    %s18 = sadd.s32 %s11, 1
    %s19 = ssub.s32 %s11, %s18
    %p20 = scmp.eq.s32.totalorder %s19, 0
    %s22 = sadd.s32 %s21, 1
    %s23 = scalar_select %p20, %s21, %s22
    %p26 = pneg %p20
    %p27 = scmp.eq.s32.totalorder %s11, 1
    %p28 = por %p26, %p27
    %p29 = scmp.ne.s32.totalorder %s21, %s24
    %p30 = scmp.eq.s32.totalorder %s11, 0
    %p31 = por %p29, %p30
    %p32 = scmp.ne.s32.totalorder %s21, %s24
    %p33 = scmp.eq.s32.totalorder %s16, 1
    %p34 = por %p32, %p33
    %p35 = scmp.ne.s32.totalorder %s24, %s25
    %p36 = scmp.eq.s32.totalorder %s16, 0
    %p37 = por %p35, %p36
    %p38 = scmp.ne.s32.totalorder %s24, %s25
    %p39 = scmp.eq.s32.totalorder %s17, 1
    %p40 = por %p38, %p39
    %p42 = scmp.ne.s32.totalorder %s25, %s41
    %p43 = scmp.eq.s32.totalorder %s17, 0
    %p44 = por %p42, %p43
    %s46 = sadd.s32 %s45, 1
    %p49 = scmp.eq.s32.totalorder %s11, 1
    %p50 = scmp.ne.s32.totalorder %s45, %s47
    %p51 = scmp.eq.s32.totalorder %s11, 0
    %p52 = por %p50, %p51
    %p53 = scmp.ne.s32.totalorder %s45, %s47
    %p54 = scmp.eq.s32.totalorder %s16, 1
    %p55 = por %p53, %p54
    %p56 = scmp.ne.s32.totalorder %s47, %s48
    %p57 = scmp.eq.s32.totalorder %s16, 0
    %p58 = por %p56, %p57
    %p59 = scmp.ne.s32.totalorder %s47, %s48
    %p60 = scmp.eq.s32.totalorder %s17, 1
    %p61 = por %p59, %p60
    %p63 = scmp.ne.s32.totalorder %s48, %s62
    %p64 = scmp.eq.s32.totalorder %s17, 0
    %p65 = por %p63, %p64
    %s67 = sadd.s32 %s66, 1
    %p70 = scmp.eq.s32.totalorder %s11, 1
    %p71 = scmp.ne.s32.totalorder %s66, %s68
    %p72 = scmp.eq.s32.totalorder %s11, 0
    %p73 = por %p71, %p72
    %p74 = scmp.ne.s32.totalorder %s66, %s68
    %p75 = scmp.eq.s32.totalorder %s16, 1
    %p76 = por %p74, %p75
    %p77 = scmp.ne.s32.totalorder %s68, %s69
    %p78 = scmp.eq.s32.totalorder %s16, 0
    %p79 = por %p77, %p78
    %p80 = scmp.ne.s32.totalorder %s68, %s69
    %p81 = scmp.eq.s32.totalorder %s17, 1
    %p82 = por %p80, %p81
    %p84 = scmp.ne.s32.totalorder %s69, %s83
    %p85 = scmp.eq.s32.totalorder %s17, 0
    %p86 = por %p84, %p85
    %s88 = sadd.s32 %s87, 1
    %p91 = scmp.eq.s32.totalorder %s11, 1
    %p92 = scmp.ne.s32.totalorder %s87, %s89
    %p93 = scmp.eq.s32.totalorder %s11, 0
    %p94 = por %p92, %p93
    %p95 = scmp.ne.s32.totalorder %s87, %s89
    %p96 = scmp.eq.s32.totalorder %s16, 1
    %p97 = por %p95, %p96
    %p98 = scmp.ne.s32.totalorder %s89, %s90
    %p99 = scmp.eq.s32.totalorder %s16, 0
    %p100 = por %p98, %p99
    %p101 = scmp.ne.s32.totalorder %s89, %s90
    %p102 = scmp.eq.s32.totalorder %s17, 1
    %p103 = por %p101, %p102
    %p105 = scmp.ne.s32.totalorder %s90, %s104
    %p106 = scmp.eq.s32.totalorder %s17, 0
    %p107 = por %p105, %p106
    %s109 = sadd.s32 %s108, 1
    %p112 = scmp.eq.s32.totalorder %s11, 1
    %p113 = scmp.ne.s32.totalorder %s108, %s110
    %p114 = scmp.eq.s32.totalorder %s11, 0
    %p115 = por %p113, %p114
    %p116 = scmp.ne.s32.totalorder %s108, %s110
    %p117 = scmp.eq.s32.totalorder %s16, 1
    %p118 = por %p116, %p117
    %p119 = scmp.ne.s32.totalorder %s110, %s111
    %p120 = scmp.eq.s32.totalorder %s16, 0
    %p121 = por %p119, %p120
    %p122 = scmp.ne.s32.totalorder %s110, %s111
    %p123 = scmp.eq.s32.totalorder %s17, 1
    %p124 = por %p122, %p123
    %p126 = scmp.ne.s32.totalorder %s111, %s125
    %p127 = scmp.eq.s32.totalorder %s17, 0
    %p128 = por %p126, %p127
    %s129 = ssub.s32 %s11, %s18
    %p130 = scmp.eq.s32.totalorder %s129, 0
    %s132 = sadd.s32 %s131, 1
    %s133 = scalar_select %p130, %s131, %s132
    %p136 = pneg %p130
    %p137 = scmp.eq.s32.totalorder %s11, 1
    %p138 = por %p136, %p137
    %p139 = scmp.ne.s32.totalorder %s131, %s134
    %p140 = scmp.eq.s32.totalorder %s11, 0
    %p141 = por %p139, %p140
    %p142 = scmp.ne.s32.totalorder %s131, %s134
    %p143 = scmp.eq.s32.totalorder %s16, 1
    %p144 = por %p142, %p143
    %p145 = scmp.ne.s32.totalorder %s134, %s135
    %p146 = scmp.eq.s32.totalorder %s16, 0
    %p147 = por %p145, %p146
    %p148 = scmp.ne.s32.totalorder %s134, %s135
    %p149 = scmp.eq.s32.totalorder %s17, 1
    %p150 = por %p148, %p149
    %p152 = scmp.ne.s32.totalorder %s135, %s151
    %p153 = scmp.eq.s32.totalorder %s17, 0
    %p154 = por %p152, %p153
    %p155 = scmp.le.s32.totalorder 1, %s11
    %p156 = scmp.lt.s32.totalorder %s11, 3
    %p157 = pnand %p155, %p156
    %p158 = pneg %p157
    // Predicated region
    $region9: #{primary_capsules_forward.1} parent=5 // pred_check
      _
    $region10: #{primary_capsules_forward.1} parent=5 // pred_check_branch
      %160 = sbr.rel (%p157) target = $region12
    $region11: #{primary_capsules_forward.1} parent=5 // pred_region
      %s161 = ssub.s32 %s11, 1
      // Predicated region
      $region13: #{primary_capsules_forward.1} parent=11 // pred_check
        %p162 = pneg %p58
      $region14: #{primary_capsules_forward.1} parent=11 // pred_check_branch
        %164 = sbr.rel (%p162) target = $region16
      $region15: #{primary_capsules_forward.1} parent=11 // pred_region
        _
      $region16: #{primary_capsules_forward.1} parent=11 // pred_fallthru
        _
      // Predicated region
      $region17: #{primary_capsules_forward.1} parent=11 // pred_check
        %p165 = pneg %p79
      $region18: #{primary_capsules_forward.1} parent=11 // pred_check_branch
        %167 = sbr.rel (%p165) target = $region20
      $region19: #{primary_capsules_forward.1} parent=11 // pred_region
        _
      $region20: #{primary_capsules_forward.1} parent=11 // pred_fallthru
        _
      // Predicated region
      $region21: #{primary_capsules_forward.1} parent=11 // pred_check
        %p168 = pneg %p100
      $region22: #{primary_capsules_forward.1} parent=11 // pred_check_branch
        %170 = sbr.rel (%p168) target = $region24
      $region23: #{primary_capsules_forward.1} parent=11 // pred_region
        _
      $region24: #{primary_capsules_forward.1} parent=11 // pred_fallthru
        _
      // Predicated region
      $region25: #{primary_capsules_forward.1} parent=11 // pred_check
        %p171 = pneg %p121
      $region26: #{primary_capsules_forward.1} parent=11 // pred_check_branch
        %173 = sbr.rel (%p171) target = $region28
      $region27: #{primary_capsules_forward.1} parent=11 // pred_region
        _
      $region28: #{primary_capsules_forward.1} parent=11 // pred_fallthru
        _
    $region12: #{primary_capsules_forward.1} parent=5 // pred_fallthru
      _
    %p174 = scmp.lt.s32.totalorder %s11, 2
    // Predicated region
    $region29: #{primary_capsules_forward.1} parent=5 // pred_check
      %p175 = pneg %p174
    $region30: #{primary_capsules_forward.1} parent=5 // pred_check_branch
      %177 = sbr.rel (%p175) target = $region32
    $region31: #{primary_capsules_forward.1} parent=5 // pred_region
      // Predicated region
      $region33: #{primary_capsules_forward.1} parent=31 // pred_check
        %p178 = pneg %p31
      $region34: #{primary_capsules_forward.1} parent=31 // pred_check_branch
        %180 = sbr.rel (%p178) target = $region36
      $region35: #{primary_capsules_forward.1} parent=31 // pred_region
        %p181 = scmp.lt.s32.totalorder %s11, 1
        %s182 = scalar_select %p181, %s11, 1
        %s183 = smul.addr %s182, 72
        %s184 = smul.addr %s183, 4
        %s185 = scalar_lea.vmem %s0, %s184
      $region36: #{primary_capsules_forward.1} parent=31 // pred_fallthru
        _
    $region32: #{primary_capsules_forward.1} parent=5 // pred_fallthru
      _
    %p186 = scmp.le.s32.totalorder 1, %s11
    %p187 = scmp.lt.s32.totalorder %s11, 3
    %p188 = pnand %p186, %p187
    %p189 = pneg %p188
    // Predicated region
    $region37: #{primary_capsules_forward.1} parent=5 // pred_check
      _
    $region38: #{primary_capsules_forward.1} parent=5 // pred_check_branch
      %191 = sbr.rel (%p188) target = $region40
    $region39: #{primary_capsules_forward.1} parent=5 // pred_region
      %s192 = ssub.s32 %s11, 1
      %p193 = scmp.lt.s32.totalorder %s16, 1
      %s194 = scalar_select %p193, %s16, 1
      %s195 = smul.addr %s194, 72
      %s196 = smul.addr %s195, 4
      %s197 = scalar_lea.vmem %s0, %s196
      %p198 = pneg %p37
      %p199 = pneg %p34
      %p200 = pneg %p58
      %p201 = pneg %p55
      %p202 = pneg %p79
      %p203 = pneg %p76
      %p204 = pneg %p100
      %p205 = pneg %p97
      %p206 = pneg %p121
      %p207 = pneg %p118
      %p208 = pneg %p147
      %p209 = pneg %p144
      %p210 = scmp.lt.s32.totalorder %s16, 1
      %s211 = scalar_select %p210, %s16, 1
      %s212 = smul.addr %s211, 32
      %s213 = smul.addr %s212, 8
      %s214 = scalar_lea.vmem %s5, %s213
      %p215 = scmp.lt.s32.totalorder %s16, 1
      %s216 = scalar_select %p215, %s16, 1
      %s217 = smul.addr %s216, 72
      %s218 = smul.addr %s217, 4
      %s219 = scalar_lea.vmem %s0, %s218
      %p220 = scmp.lt.s32.totalorder %s16, 1
      %s221 = scalar_select %p220, %s16, 1
      %s222 = smul.addr %s221, 32
      %s223 = smul.addr %s222, 8
      %s224 = scalar_lea.vmem %s5, %s223
      %v226 = vld [vmem:[%s1] sm:$0xff]
      %v227 = vld [vmem:[%s1 + $0x8] sm:$0xf]
      %v228 = vld [vmem:[%s1 + $0xc] sm:$0xff]
      %v229 = vld [vmem:[%s1 + $0x14] sm:$0xf]
      %v230 = vld [vmem:[%s1 + $0x18] sm:$0xff]
      %v231 = vld [vmem:[%s1 + $0x20] sm:$0xf]
      %v232 = vld [vmem:[%s1 + $0x24] sm:$0xff]
      %v233 = vld [vmem:[%s1 + $0x2c] sm:$0xf]
      %v234 = vld [vmem:[%s1 + $0x30] sm:$0xff]
      %v235 = vld [vmem:[%s1 + $0x38] sm:$0xf]
      %v236 = vld [vmem:[%s1 + $0x3c] sm:$0xff]
      %v237 = vld [vmem:[%s1 + $0x44] sm:$0xf]
      %v238 = vld [vmem:[%s1 + $0x48] sm:$0xff]
      %v239 = vld [vmem:[%s1 + $0x50] sm:$0xf]
      %v240 = vld [vmem:[%s1 + $0x54] sm:$0xff]
      %v241 = vld [vmem:[%s1 + $0x5c] sm:$0xf]
      %v242 = vld [vmem:[%s1 + $0x60] sm:$0xff]
      %v243 = vld [vmem:[%s1 + $0x68] sm:$0xf]
      %v244 = vld [vmem:[%s1 + $0x6c] sm:$0xff]
      %v245 = vld [vmem:[%s1 + $0x74] sm:$0xf]
      %v246 = vld [vmem:[%s1 + $0x78] sm:$0xff]
      %v247 = vld [vmem:[%s1 + $0x80] sm:$0xf]
      %v248 = vld [vmem:[%s1 + $0x84] sm:$0xff]
      %v249 = vld [vmem:[%s1 + $0x8c] sm:$0xf]
      %v250 = vld [vmem:[%s1 + $0x90] sm:$0xff]
      %v251 = vld [vmem:[%s1 + $0x98] sm:$0xf]
      %v252 = vld [vmem:[%s1 + $0x9c] sm:$0xff]
      %v253 = vld [vmem:[%s1 + $0xa4] sm:$0xf]
      %v254 = vld [vmem:[%s1 + $0xa8] sm:$0xff]
      %v255 = vld [vmem:[%s1 + $0xb0] sm:$0xf]
      %v256 = vld [vmem:[%s1 + $0xb4] sm:$0xff]
      %v257 = vld [vmem:[%s1 + $0xbc] sm:$0xf]
      %v258 = vld [vmem:[%s219] sm:$0xff]
      %v259 = vld [vmem:[%s219 + $0x8] sm:$0xff]
      %v260 = vld [vmem:[%s219 + $0x10] sm:$0xff]
      %v261 = vld [vmem:[%s219 + $0x18] sm:$0xff]
      %v262 = vld [vmem:[%s219 + $0x20] sm:$0xff]
      %v263 = vld [vmem:[%s219 + $0x28] sm:$0xff]
      %v264 = vld [vmem:[%s219 + $0x30] sm:$0xff]
      %v265 = vld [vmem:[%s219 + $0x38] sm:$0xff]
      %v266 = vld [vmem:[%s219 + $0x40] sm:$0xff]
      %v267 = vld [vmem:[%s219 + $0x48] sm:$0xff]
      %v268 = vld [vmem:[%s219 + $0x50] sm:$0xff]
      %v269 = vld [vmem:[%s219 + $0x58] sm:$0xff]
      %v270 = vld [vmem:[%s219 + $0x60] sm:$0xff]
      %v271 = vld [vmem:[%s219 + $0x68] sm:$0xff]
      %v272 = vld [vmem:[%s219 + $0x70] sm:$0xff]
      %v273 = vld [vmem:[%s219 + $0x78] sm:$0xff]
      %v274 = vld [vmem:[%s219 + $0x80] sm:$0xff]
      %v275 = vld [vmem:[%s219 + $0x88] sm:$0xff]
      %v276 = vld [vmem:[%s219 + $0x90] sm:$0xff]
      %v277 = vld [vmem:[%s219 + $0x98] sm:$0xff]
      %v278 = vld [vmem:[%s219 + $0xa0] sm:$0xff]
      %v279 = vld [vmem:[%s219 + $0xa8] sm:$0xff]
      %v280 = vld [vmem:[%s219 + $0xb0] sm:$0xff]
      %v281 = vld [vmem:[%s219 + $0xb8] sm:$0xff]
      %v282 = vld [vmem:[%s219 + $0xc0] sm:$0xff]
      %v283 = vld [vmem:[%s219 + $0xc8] sm:$0xff]
      %v284 = vld [vmem:[%s219 + $0xd0] sm:$0xff]
      %v285 = vld [vmem:[%s219 + $0xd8] sm:$0xff]
      %v286 = vld [vmem:[%s219 + $0xe0] sm:$0xff]
      %v287 = vld [vmem:[%s219 + $0xe8] sm:$0xff]
      %v288 = vld [vmem:[%s219 + $0xf0] sm:$0xff]
      %v289 = vld [vmem:[%s219 + $0xf8] sm:$0xff]
      %v290 = vld [vmem:[%s219 + $0x100] sm:$0xff]
      %v291 = vld [vmem:[%s219 + $0x108] sm:$0xff]
      %v292 = vld [vmem:[%s219 + $0x110] sm:$0xff]
      %v293 = vld [vmem:[%s219 + $0x118] sm:$0xff]
      %v294 = vld [vmem:[%s2] sm:$0xff]
      %v295 = vld [vmem:[%s2 + $0x8] sm:$0xff]
      %v296 = vld [vmem:[%s2 + $0x10] sm:$0xff]
      %v297 = vld [vmem:[%s2 + $0x18] sm:$0xff]
      %v298 = vld [vmem:[%s2 + $0x20] sm:$0xff]
      %v299 = vld [vmem:[%s2 + $0x28] sm:$0xff]
      %v300 = vld [vmem:[%s2 + $0x30] sm:$0xff]
      %v301 = vld [vmem:[%s2 + $0x38] sm:$0xff]
      %v302 = vld [vmem:[%s2 + $0x40] sm:$0xff]
      %v303 = vld [vmem:[%s2 + $0x48] sm:$0xff]
      %v304 = vld [vmem:[%s2 + $0x50] sm:$0xff]
      %v305 = vld [vmem:[%s2 + $0x58] sm:$0xff]
      %v306 = vld [vmem:[%s2 + $0x60] sm:$0xff]
      %v307 = vld [vmem:[%s2 + $0x68] sm:$0xff]
      %v308 = vld [vmem:[%s2 + $0x70] sm:$0xff]
      %v309 = vld [vmem:[%s2 + $0x78] sm:$0xff]
      %311 = vset.pattern.permute.xlu0 0
      %312 = vperm.xlu0 %311, %v294
      %v313 = vpop.permute.xlu0 %312
      %316 = vset.pattern.permute.xlu0 0
      %317 = vperm.xlu0 %316, %v295
      %v318 = vpop.permute.xlu0 %317
      %321 = vset.pattern.permute.xlu0 0
      %322 = vperm.xlu0 %321, %v296
      %v323 = vpop.permute.xlu0 %322
      %326 = vset.pattern.permute.xlu0 0
      %327 = vperm.xlu0 %326, %v297
      %v328 = vpop.permute.xlu0 %327
      %331 = vset.pattern.permute.xlu0 0
      %332 = vperm.xlu0 %331, %v298
      %v333 = vpop.permute.xlu0 %332
      %336 = vset.pattern.permute.xlu0 0
      %337 = vperm.xlu0 %336, %v299
      %v338 = vpop.permute.xlu0 %337
      %341 = vset.pattern.permute.xlu0 0
      %342 = vperm.xlu0 %341, %v300
      %v343 = vpop.permute.xlu0 %342
      %346 = vset.pattern.permute.xlu0 0
      %347 = vperm.xlu0 %346, %v301
      %v348 = vpop.permute.xlu0 %347
      %351 = vset.pattern.permute.xlu0 0
      %352 = vperm.xlu0 %351, %v302
      %v353 = vpop.permute.xlu0 %352
      %356 = vset.pattern.permute.xlu0 0
      %357 = vperm.xlu0 %356, %v303
      %v358 = vpop.permute.xlu0 %357
      %361 = vset.pattern.permute.xlu0 0
      %362 = vperm.xlu0 %361, %v304
      %v363 = vpop.permute.xlu0 %362
      %366 = vset.pattern.permute.xlu0 0
      %367 = vperm.xlu0 %366, %v305
      %v368 = vpop.permute.xlu0 %367
      %371 = vset.pattern.permute.xlu0 0
      %372 = vperm.xlu0 %371, %v306
      %v373 = vpop.permute.xlu0 %372
      %376 = vset.pattern.permute.xlu0 0
      %377 = vperm.xlu0 %376, %v307
      %v378 = vpop.permute.xlu0 %377
      %381 = vset.pattern.permute.xlu0 0
      %382 = vperm.xlu0 %381, %v308
      %v383 = vpop.permute.xlu0 %382
      %386 = vset.pattern.permute.xlu0 0
      %387 = vperm.xlu0 %386, %v309
      %v388 = vpop.permute.xlu0 %387
      %v422 = vunpack.c.l.b16 %v226
      %v423 = vunpack.c.h.b16 %v226
      %v424 = vunpack.c.l.b16 %v227
      %v425 = vunpack.c.l.b16 %v228
      %v426 = vunpack.c.h.b16 %v228
      %v427 = vunpack.c.l.b16 %v229
      %v428 = vunpack.c.l.b16 %v230
      %v429 = vunpack.c.h.b16 %v230
      %v430 = vunpack.c.l.b16 %v231
      %v431 = vunpack.c.l.b16 %v232
      %v432 = vunpack.c.h.b16 %v232
      %v433 = vunpack.c.l.b16 %v233
      %v434 = vunpack.c.l.b16 %v234
      %v435 = vunpack.c.h.b16 %v234
      %v436 = vunpack.c.l.b16 %v235
      %v437 = vunpack.c.l.b16 %v236
      %v438 = vunpack.c.h.b16 %v236
      %v439 = vunpack.c.l.b16 %v237
      %v440 = vunpack.c.l.b16 %v238
      %v441 = vunpack.c.h.b16 %v238
      %v442 = vunpack.c.l.b16 %v239
      %v443 = vunpack.c.l.b16 %v240
      %v444 = vunpack.c.h.b16 %v240
      %v445 = vunpack.c.l.b16 %v241
      %v446 = vunpack.c.l.b16 %v242
      %v447 = vunpack.c.h.b16 %v242
      %v448 = vunpack.c.l.b16 %v243
      %v449 = vunpack.c.l.b16 %v244
      %v450 = vunpack.c.h.b16 %v244
      %v451 = vunpack.c.l.b16 %v245
      %v452 = vunpack.c.l.b16 %v246
      %v453 = vunpack.c.h.b16 %v246
      %v454 = vunpack.c.l.b16 %v247
      %v455 = vunpack.c.l.b16 %v248
      %v456 = vunpack.c.h.b16 %v248
      %v457 = vunpack.c.l.b16 %v249
      %v458 = vunpack.c.l.b16 %v250
      %v459 = vunpack.c.h.b16 %v250
      %v460 = vunpack.c.l.b16 %v251
      %v461 = vunpack.c.l.b16 %v252
      %v462 = vunpack.c.h.b16 %v252
      %v463 = vunpack.c.l.b16 %v253
      %v464 = vunpack.c.l.b16 %v254
      %v465 = vunpack.c.h.b16 %v254
      %v466 = vunpack.c.l.b16 %v255
      %v467 = vunpack.c.l.b16 %v256
      %v468 = vunpack.c.h.b16 %v256
      %v469 = vunpack.c.l.b16 %v257
      %v470 = vpack.c.b16 %v425, %v422
      %v471 = vpack.c.b16 %v426, %v423
      %v472 = vpack.c.b16 %v427, %v424
      %v473 = vpack.c.b16 %v431, %v428
      %v474 = vpack.c.b16 %v432, %v429
      %v475 = vpack.c.b16 %v433, %v430
      %v476 = vpack.c.b16 %v437, %v434
      %v477 = vpack.c.b16 %v438, %v435
      %v478 = vpack.c.b16 %v439, %v436
      %v479 = vpack.c.b16 %v443, %v440
      %v480 = vpack.c.b16 %v444, %v441
      %v481 = vpack.c.b16 %v445, %v442
      %v482 = vpack.c.b16 %v449, %v446
      %v483 = vpack.c.b16 %v450, %v447
      %v484 = vpack.c.b16 %v451, %v448
      %v485 = vpack.c.b16 %v455, %v452
      %v486 = vpack.c.b16 %v456, %v453
      %v487 = vpack.c.b16 %v457, %v454
      %v488 = vpack.c.b16 %v461, %v458
      %v489 = vpack.c.b16 %v462, %v459
      %v490 = vpack.c.b16 %v463, %v460
      %v491 = vpack.c.b16 %v467, %v464
      %v492 = vpack.c.b16 %v468, %v465
      %v493 = vpack.c.b16 %v469, %v466
      %v546 = vunpack.c.l.b16 %v258
      %v547 = vunpack.c.h.b16 %v258
      %v548 = vunpack.c.l.b16 %v259
      %v549 = vunpack.c.h.b16 %v259
      %v550 = vunpack.c.l.b16 %v260
      %v551 = vunpack.c.h.b16 %v260
      %v552 = vunpack.c.l.b16 %v261
      %v553 = vunpack.c.h.b16 %v261
      %v554 = vunpack.c.l.b16 %v262
      %v555 = vunpack.c.h.b16 %v262
      %v556 = vunpack.c.l.b16 %v263
      %v557 = vunpack.c.h.b16 %v263
      %v558 = vunpack.c.l.b16 %v264
      %v559 = vunpack.c.h.b16 %v264
      %v560 = vunpack.c.l.b16 %v265
      %v561 = vunpack.c.h.b16 %v265
      %v562 = vunpack.c.l.b16 %v266
      %v563 = vunpack.c.h.b16 %v266
      %v564 = vunpack.c.l.b16 %v267
      %v565 = vunpack.c.h.b16 %v267
      %v566 = vunpack.c.l.b16 %v268
      %v567 = vunpack.c.h.b16 %v268
      %v568 = vunpack.c.l.b16 %v269
      %v569 = vunpack.c.h.b16 %v269
      %v570 = vunpack.c.l.b16 %v270
      %v571 = vunpack.c.h.b16 %v270
      %v572 = vunpack.c.l.b16 %v271
      %v573 = vunpack.c.h.b16 %v271
      %v574 = vunpack.c.l.b16 %v272
      %v575 = vunpack.c.h.b16 %v272
      %v576 = vunpack.c.l.b16 %v273
      %v577 = vunpack.c.h.b16 %v273
      %v578 = vunpack.c.l.b16 %v274
      %v579 = vunpack.c.h.b16 %v274
      %v580 = vunpack.c.l.b16 %v275
      %v581 = vunpack.c.h.b16 %v275
      %v582 = vunpack.c.l.b16 %v276
      %v583 = vunpack.c.h.b16 %v276
      %v584 = vunpack.c.l.b16 %v277
      %v585 = vunpack.c.h.b16 %v277
      %v586 = vunpack.c.l.b16 %v278
      %v587 = vunpack.c.h.b16 %v278
      %v588 = vunpack.c.l.b16 %v279
      %v589 = vunpack.c.h.b16 %v279
      %v590 = vunpack.c.l.b16 %v280
      %v591 = vunpack.c.h.b16 %v280
      %v592 = vunpack.c.l.b16 %v281
      %v593 = vunpack.c.h.b16 %v281
      %v594 = vunpack.c.l.b16 %v282
      %v595 = vunpack.c.h.b16 %v282
      %v596 = vunpack.c.l.b16 %v283
      %v597 = vunpack.c.h.b16 %v283
      %v598 = vunpack.c.l.b16 %v284
      %v599 = vunpack.c.h.b16 %v284
      %v600 = vunpack.c.l.b16 %v285
      %v601 = vunpack.c.h.b16 %v285
      %v602 = vunpack.c.l.b16 %v286
      %v603 = vunpack.c.h.b16 %v286
      %v604 = vunpack.c.l.b16 %v287
      %v605 = vunpack.c.h.b16 %v287
      %v606 = vunpack.c.l.b16 %v288
      %v607 = vunpack.c.h.b16 %v288
      %v608 = vunpack.c.l.b16 %v289
      %v609 = vunpack.c.h.b16 %v289
      %v610 = vunpack.c.l.b16 %v290
      %v611 = vunpack.c.h.b16 %v290
      %v612 = vunpack.c.l.b16 %v291
      %v613 = vunpack.c.h.b16 %v291
      %v614 = vunpack.c.l.b16 %v292
      %v615 = vunpack.c.h.b16 %v292
      %v616 = vunpack.c.l.b16 %v293
      %v617 = vunpack.c.h.b16 %v293
      %v618 = vpack.c.b16 %v548, %v546
      %v619 = vpack.c.b16 %v549, %v547
      %v620 = vpack.c.b16 %v552, %v550
      %v621 = vpack.c.b16 %v553, %v551
      %v622 = vpack.c.b16 %v556, %v554
      %v623 = vpack.c.b16 %v557, %v555
      %v624 = vpack.c.b16 %v560, %v558
      %v625 = vpack.c.b16 %v561, %v559
      %v626 = vpack.c.b16 %v564, %v562
      %v627 = vpack.c.b16 %v565, %v563
      %v628 = vpack.c.b16 %v568, %v566
      %v629 = vpack.c.b16 %v569, %v567
      %v630 = vpack.c.b16 %v572, %v570
      %v631 = vpack.c.b16 %v573, %v571
      %v632 = vpack.c.b16 %v576, %v574
      %v633 = vpack.c.b16 %v577, %v575
      %v634 = vpack.c.b16 %v580, %v578
      %v635 = vpack.c.b16 %v581, %v579
      %v636 = vpack.c.b16 %v584, %v582
      %v637 = vpack.c.b16 %v585, %v583
      %v638 = vpack.c.b16 %v588, %v586
      %v639 = vpack.c.b16 %v589, %v587
      %v640 = vpack.c.b16 %v592, %v590
      %v641 = vpack.c.b16 %v593, %v591
      %v642 = vpack.c.b16 %v596, %v594
      %v643 = vpack.c.b16 %v597, %v595
      %v644 = vpack.c.b16 %v600, %v598
      %v645 = vpack.c.b16 %v601, %v599
      %v646 = vpack.c.b16 %v604, %v602
      %v647 = vpack.c.b16 %v605, %v603
      %v648 = vpack.c.b16 %v608, %v606
      %v649 = vpack.c.b16 %v609, %v607
      %v650 = vpack.c.b16 %v612, %v610
      %v651 = vpack.c.b16 %v613, %v611
      %v652 = vpack.c.b16 %v616, %v614
      %v653 = vpack.c.b16 %v617, %v615
      %vm690 = vcmask 261120
      %v692 = vsel %vm690, %v472, 0
      %v695 = vsel %vm690, %v475, 0
      %v698 = vsel %vm690, %v478, 0
      %v701 = vsel %vm690, %v481, 0
      %v704 = vsel %vm690, %v484, 0
      %v707 = vsel %vm690, %v487, 0
      %v710 = vsel %vm690, %v490, 0
      %v713 = vsel %vm690, %v493, 0
      %715 = vmatprep.subr.bf16.mxu0 %v619
      %716 = vmatpush1.bf16.msra.mxu0 %v618
      %717 = vmatprep.subr.bf16.mxu0 %v621
      %718 = vmatpush1.bf16.msra.mxu0 %v620
      %719 = vmatprep.subr.bf16.mxu0 %v623
      %720 = vmatpush1.bf16.msra.mxu0 %v622
      %721 = vmatprep.subr.bf16.mxu0 %v625
      %722 = vmatpush1.bf16.msra.mxu0 %v624
      %723 = vmatprep.subr.bf16.mxu0 %v627
      %724 = vmatpush1.bf16.msra.mxu0 %v626
      %725 = vmatprep.subr.bf16.mxu0 %v629
      %726 = vmatpush1.bf16.msra.mxu0 %v628
      %727 = vmatprep.subr.bf16.mxu0 %v631
      %728 = vmatpush1.bf16.msra.mxu0 %v630
      %729 = vmatprep.subr.bf16.mxu0 %v633
      %730 = vmatpush1.bf16.msra.mxu0 %v632
      %731 = vmatprep.subr.bf16.mxu0 %v635
      %732 = vmatpush1.bf16.msra.mxu0 %v634
      %733 = vmatprep.subr.bf16.mxu0 %v637
      %734 = vmatpush1.bf16.msra.mxu0 %v636
      %735 = vmatprep.subr.bf16.mxu0 %v639
      %736 = vmatpush1.bf16.msra.mxu0 %v638
      %737 = vmatprep.subr.bf16.mxu0 %v641
      %738 = vmatpush1.bf16.msra.mxu0 %v640
      %739 = vmatprep.subr.bf16.mxu0 %v643
      %740 = vmatpush1.bf16.msra.mxu0 %v642
      %741 = vmatprep.subr.bf16.mxu0 %v645
      %742 = vmatpush1.bf16.msra.mxu0 %v644
      %743 = vmatprep.subr.bf16.mxu0 %v647
      %744 = vmatpush1.bf16.msra.mxu0 %v646
      %745 = vmatprep.subr.bf16.mxu0 %v649
      %746 = vmatpush1.bf16.msra.mxu0 %v648
      %747 = vmatprep.mubr.bf16.mxu0 %v471
      %748 = vmatmul.mubr.bf16.gmra.mrb[0].mxu0 %v470
      %v749 = vpop.f32.mrb[0].mxu0
      %v750 = vadd.f32 %v313, %v749
      %v751 = vpop.f32.mrb[0].mxu0
      %v752 = vadd.f32 %v313, %v751
      %v753 = vpop.f32.mrb[0].mxu0
      %v754 = vadd.f32 %v318, %v753
      %v755 = vpop.f32.mrb[0].mxu0
      %v756 = vadd.f32 %v318, %v755
      %757 = vmatprep.mubr.bf16.mxu0 %v474
      %758 = vmatmul.mubr.bf16.gmra.mrb[0].mxu0 %v473
      %v759 = vpop.f32.mrb[0].mxu0
      %v760 = vadd.f32 %v323, %v759
      %v761 = vpop.f32.mrb[0].mxu0
      %v762 = vadd.f32 %v323, %v761
      %v763 = vpop.f32.mrb[0].mxu0
      %v764 = vadd.f32 %v328, %v763
      %v765 = vpop.f32.mrb[0].mxu0
      %v766 = vadd.f32 %v328, %v765
      %767 = vmatprep.mubr.bf16.mxu0 %v477
      %768 = vmatmul.mubr.bf16.gmra.mrb[0].mxu0 %v476
      %v769 = vpop.f32.mrb[0].mxu0
      %v770 = vadd.f32 %v333, %v769
      %v771 = vpop.f32.mrb[0].mxu0
      %v772 = vadd.f32 %v333, %v771
      %v773 = vpop.f32.mrb[0].mxu0
      %v774 = vadd.f32 %v338, %v773
      %v775 = vpop.f32.mrb[0].mxu0
      %v776 = vadd.f32 %v338, %v775
      %777 = vmatprep.mubr.bf16.mxu0 %v480
      %778 = vmatmul.mubr.bf16.gmra.mrb[0].mxu0 %v479
      %v779 = vpop.f32.mrb[0].mxu0
      %v780 = vadd.f32 %v343, %v779
      %v781 = vpop.f32.mrb[0].mxu0
      %v782 = vadd.f32 %v343, %v781
      %v783 = vpop.f32.mrb[0].mxu0
      %v784 = vadd.f32 %v348, %v783
      %v785 = vpop.f32.mrb[0].mxu0
      %v786 = vadd.f32 %v348, %v785
      %787 = vmatprep.mubr.bf16.mxu0 %v483
      %788 = vmatmul.mubr.bf16.gmra.mrb[0].mxu0 %v482
      %v789 = vpop.f32.mrb[0].mxu0
      %v790 = vadd.f32 %v353, %v789
      %v791 = vpop.f32.mrb[0].mxu0
      %v792 = vadd.f32 %v353, %v791
      %v793 = vpop.f32.mrb[0].mxu0
      %v794 = vadd.f32 %v358, %v793
      %v795 = vpop.f32.mrb[0].mxu0
      %v796 = vadd.f32 %v358, %v795
      %797 = vmatprep.mubr.bf16.mxu0 %v486
      %798 = vmatmul.mubr.bf16.gmra.mrb[0].mxu0 %v485
      %v799 = vpop.f32.mrb[0].mxu0
      %v800 = vadd.f32 %v363, %v799
      %v801 = vpop.f32.mrb[0].mxu0
      %v802 = vadd.f32 %v363, %v801
      %v803 = vpop.f32.mrb[0].mxu0
      %v804 = vadd.f32 %v368, %v803
      %v805 = vpop.f32.mrb[0].mxu0
      %v806 = vadd.f32 %v368, %v805
      %807 = vmatprep.mubr.bf16.mxu0 %v489
      %808 = vmatmul.mubr.bf16.gmra.mrb[0].mxu0 %v488
      %v809 = vpop.f32.mrb[0].mxu0
      %v810 = vadd.f32 %v373, %v809
      %v811 = vpop.f32.mrb[0].mxu0
      %v812 = vadd.f32 %v373, %v811
      %v813 = vpop.f32.mrb[0].mxu0
      %v814 = vadd.f32 %v378, %v813
      %v815 = vpop.f32.mrb[0].mxu0
      %v816 = vadd.f32 %v378, %v815
      %817 = vmatprep.mubr.bf16.mxu0 %v492
      %818 = vmatmul.mubr.bf16.gmra.mrb[0].mxu0 %v491
      %v819 = vpop.f32.mrb[0].mxu0
      %v820 = vadd.f32 %v383, %v819
      %v821 = vpop.f32.mrb[0].mxu0
      %v822 = vadd.f32 %v383, %v821
      %v823 = vpop.f32.mrb[0].mxu0
      %v824 = vadd.f32 %v388, %v823
      %v825 = vpop.f32.mrb[0].mxu0
      %v826 = vadd.f32 %v388, %v825
      %827 = vdwg.mxu0
      %828 = vmatprep.subr.bf16.mxu0 %v651
      %829 = vmatpush1.bf16.msra.mxu0 %v650
      %830 = vmatprep.subr.bf16.mxu0 %v653
      %831 = vmatpush1.bf16.msra.mxu0 %v652
      %832 = vmatprep.subr.bf16.mxu0 0
      %833 = vmatpush1.bf16.msra.mxu0 0
      %834 = vmatprep.subr.bf16.mxu0 0
      %835 = vmatpush1.bf16.msra.mxu0 0
      %836 = vmatprep.subr.bf16.mxu0 0
      %837 = vmatpush1.bf16.msra.mxu0 0
      %838 = vmatprep.subr.bf16.mxu0 0
      %839 = vmatpush1.bf16.msra.mxu0 0
      %840 = vmatprep.subr.bf16.mxu0 0
      %841 = vmatpush1.bf16.msra.mxu0 0
      %842 = vmatprep.subr.bf16.mxu0 0
      %843 = vmatpush1.bf16.msra.mxu0 0
      %844 = vmatprep.subr.bf16.mxu0 0
      %845 = vmatpush1.bf16.msra.mxu0 0
      %846 = vmatprep.subr.bf16.mxu0 0
      %847 = vmatpush1.bf16.msra.mxu0 0
      %848 = vmatprep.subr.bf16.mxu0 0
      %849 = vmatpush1.bf16.msra.mxu0 0
      %850 = vmatprep.subr.bf16.mxu0 0
      %851 = vmatpush1.bf16.msra.mxu0 0
      %852 = vmatprep.subr.bf16.mxu0 0
      %853 = vmatpush1.bf16.msra.mxu0 0
      %854 = vmatprep.subr.bf16.mxu0 0
      %855 = vmatpush1.bf16.msra.mxu0 0
      %856 = vmatprep.subr.bf16.mxu0 0
      %857 = vmatpush1.bf16.msra.mxu0 0
      %858 = vmatprep.subr.bf16.mxu0 0
      %859 = vmatpush1.bf16.msra.mxu0 0
      %860 = vmatprep.mubr.bf16.mxu0 0
      %861 = vmatmul.mubr.bf16.gmra.mrb[0].mxu0 %v692
      %v862 = vpop.f32.mrb[0].mxu0
      %v863 = vadd.f32 %v750, %v862
      %v864 = vpop.f32.mrb[0].mxu0
      %v865 = vadd.f32 %v752, %v864
      %v866 = vpop.f32.mrb[0].mxu0
      %v867 = vadd.f32 %v754, %v866
      %v868 = vpop.f32.mrb[0].mxu0
      %v869 = vadd.f32 %v756, %v868
      %870 = vmatprep.mubr.bf16.mxu0 0
      %871 = vmatmul.mubr.bf16.gmra.mrb[0].mxu0 %v695
      %v872 = vpop.f32.mrb[0].mxu0
      %v873 = vadd.f32 %v760, %v872
      %v874 = vpop.f32.mrb[0].mxu0
      %v875 = vadd.f32 %v762, %v874
      %v876 = vpop.f32.mrb[0].mxu0
      %v877 = vadd.f32 %v764, %v876
      %v878 = vpop.f32.mrb[0].mxu0
      %v879 = vadd.f32 %v766, %v878
      %880 = vmatprep.mubr.bf16.mxu0 0
      %881 = vmatmul.mubr.bf16.gmra.mrb[0].mxu0 %v698
      %v882 = vpop.f32.mrb[0].mxu0
      %v883 = vadd.f32 %v770, %v882
      %v884 = vpop.f32.mrb[0].mxu0
      %v885 = vadd.f32 %v772, %v884
      %v886 = vpop.f32.mrb[0].mxu0
      %v887 = vadd.f32 %v774, %v886
      %v888 = vpop.f32.mrb[0].mxu0
      %v889 = vadd.f32 %v776, %v888
      %890 = vmatprep.mubr.bf16.mxu0 0
      %891 = vmatmul.mubr.bf16.gmra.mrb[0].mxu0 %v701
      %v892 = vpop.f32.mrb[0].mxu0
      %v893 = vadd.f32 %v780, %v892
      %v894 = vpop.f32.mrb[0].mxu0
      %v895 = vadd.f32 %v782, %v894
      %v896 = vpop.f32.mrb[0].mxu0
      %v897 = vadd.f32 %v784, %v896
      %v898 = vpop.f32.mrb[0].mxu0
      %v899 = vadd.f32 %v786, %v898
      %900 = vmatprep.mubr.bf16.mxu0 0
      %901 = vmatmul.mubr.bf16.gmra.mrb[0].mxu0 %v704
      %v902 = vpop.f32.mrb[0].mxu0
      %v903 = vadd.f32 %v790, %v902
      %v904 = vpop.f32.mrb[0].mxu0
      %v905 = vadd.f32 %v792, %v904
      %v906 = vpop.f32.mrb[0].mxu0
      %v907 = vadd.f32 %v794, %v906
      %v908 = vpop.f32.mrb[0].mxu0
      %v909 = vadd.f32 %v796, %v908
      %910 = vmatprep.mubr.bf16.mxu0 0
      %911 = vmatmul.mubr.bf16.gmra.mrb[0].mxu0 %v707
      %v912 = vpop.f32.mrb[0].mxu0
      %v913 = vadd.f32 %v800, %v912
      %v914 = vpop.f32.mrb[0].mxu0
      %v915 = vadd.f32 %v802, %v914
      %v916 = vpop.f32.mrb[0].mxu0
      %v917 = vadd.f32 %v804, %v916
      %v918 = vpop.f32.mrb[0].mxu0
      %v919 = vadd.f32 %v806, %v918
      %920 = vmatprep.mubr.bf16.mxu0 0
      %921 = vmatmul.mubr.bf16.gmra.mrb[0].mxu0 %v710
      %v922 = vpop.f32.mrb[0].mxu0
      %v923 = vadd.f32 %v810, %v922
      %v924 = vpop.f32.mrb[0].mxu0
      %v925 = vadd.f32 %v812, %v924
      %v926 = vpop.f32.mrb[0].mxu0
      %v927 = vadd.f32 %v814, %v926
      %v928 = vpop.f32.mrb[0].mxu0
      %v929 = vadd.f32 %v816, %v928
      %930 = vmatprep.mubr.bf16.mxu0 0
      %931 = vmatmul.mubr.bf16.gmra.mrb[0].mxu0 %v713
      %v932 = vpop.f32.mrb[0].mxu0
      %v933 = vadd.f32 %v820, %v932
      %v934 = vpop.f32.mrb[0].mxu0
      %v935 = vadd.f32 %v822, %v934
      %v936 = vpop.f32.mrb[0].mxu0
      %v937 = vadd.f32 %v824, %v936
      %v938 = vpop.f32.mrb[0].mxu0
      %v939 = vadd.f32 %v826, %v938
      %940 = vdwg.mxu0
      %v941 = vmin.f32 %v863, 0.0
      %v942 = vmin.f32 %v865, 0.0
      %v943 = vmin.f32 %v867, 0.0
      %v944 = vmin.f32 %v869, 0.0
      %v945 = vmin.f32 %v873, 0.0
      %v946 = vmin.f32 %v875, 0.0
      %v947 = vmin.f32 %v877, 0.0
      %v948 = vmin.f32 %v879, 0.0
      %v949 = vmin.f32 %v883, 0.0
      %v950 = vmin.f32 %v885, 0.0
      %v951 = vmin.f32 %v887, 0.0
      %v952 = vmin.f32 %v889, 0.0
      %v953 = vmin.f32 %v893, 0.0
      %v954 = vmin.f32 %v895, 0.0
      %v955 = vmin.f32 %v897, 0.0
      %v956 = vmin.f32 %v899, 0.0
      %v957 = vmin.f32 %v903, 0.0
      %v958 = vmin.f32 %v905, 0.0
      %v959 = vmin.f32 %v907, 0.0
      %v960 = vmin.f32 %v909, 0.0
      %v961 = vmin.f32 %v913, 0.0
      %v962 = vmin.f32 %v915, 0.0
      %v963 = vmin.f32 %v917, 0.0
      %v964 = vmin.f32 %v919, 0.0
      %v965 = vmin.f32 %v923, 0.0
      %v966 = vmin.f32 %v925, 0.0
      %v967 = vmin.f32 %v927, 0.0
      %v968 = vmin.f32 %v929, 0.0
      %v969 = vmin.f32 %v933, 0.0
      %v970 = vmin.f32 %v935, 0.0
      %v971 = vmin.f32 %v937, 0.0
      %v972 = vmin.f32 %v939, 0.0
      %v973 = vmul.f32 %v941, 1.442695
      %v974 = vpow.pop %v973
      %v975 = vmul.f32 %v942, 1.442695
      %v976 = vpow.pop %v975
      %v977 = vmul.f32 %v943, 1.442695
      %v978 = vpow.pop %v977
      %v979 = vmul.f32 %v944, 1.442695
      %v980 = vpow.pop %v979
      %v981 = vmul.f32 %v945, 1.442695
      %v982 = vpow.pop %v981
      %v983 = vmul.f32 %v946, 1.442695
      %v984 = vpow.pop %v983
      %v985 = vmul.f32 %v947, 1.442695
      %v986 = vpow.pop %v985
      %v987 = vmul.f32 %v948, 1.442695
      %v988 = vpow.pop %v987
      %v989 = vmul.f32 %v949, 1.442695
      %v990 = vpow.pop %v989
      %v991 = vmul.f32 %v950, 1.442695
      %v992 = vpow.pop %v991
      %v993 = vmul.f32 %v951, 1.442695
      %v994 = vpow.pop %v993
      %v995 = vmul.f32 %v952, 1.442695
      %v996 = vpow.pop %v995
      %v997 = vmul.f32 %v953, 1.442695
      %v998 = vpow.pop %v997
      %v999 = vmul.f32 %v954, 1.442695
      %v1000 = vpow.pop %v999
      %v1001 = vmul.f32 %v955, 1.442695
      %v1002 = vpow.pop %v1001
      %v1003 = vmul.f32 %v956, 1.442695
      %v1004 = vpow.pop %v1003
      %v1005 = vmul.f32 %v957, 1.442695
      %v1006 = vpow.pop %v1005
      %v1007 = vmul.f32 %v958, 1.442695
      %v1008 = vpow.pop %v1007
      %v1009 = vmul.f32 %v959, 1.442695
      %v1010 = vpow.pop %v1009
      %v1011 = vmul.f32 %v960, 1.442695
      %v1012 = vpow.pop %v1011
      %v1013 = vmul.f32 %v961, 1.442695
      %v1014 = vpow.pop %v1013
      %v1015 = vmul.f32 %v962, 1.442695
      %v1016 = vpow.pop %v1015
      %v1017 = vmul.f32 %v963, 1.442695
      %v1018 = vpow.pop %v1017
      %v1019 = vmul.f32 %v964, 1.442695
      %v1020 = vpow.pop %v1019
      %v1021 = vmul.f32 %v965, 1.442695
      %v1022 = vpow.pop %v1021
      %v1023 = vmul.f32 %v966, 1.442695
      %v1024 = vpow.pop %v1023
      %v1025 = vmul.f32 %v967, 1.442695
      %v1026 = vpow.pop %v1025
      %v1027 = vmul.f32 %v968, 1.442695
      %v1028 = vpow.pop %v1027
      %v1029 = vmul.f32 %v969, 1.442695
      %v1030 = vpow.pop %v1029
      %v1031 = vmul.f32 %v970, 1.442695
      %v1032 = vpow.pop %v1031
      %v1033 = vmul.f32 %v971, 1.442695
      %v1034 = vpow.pop %v1033
      %v1035 = vmul.f32 %v972, 1.442695
      %v1036 = vpow.pop %v1035
      %v1037 = vsub.f32 %v974, 1.0
      %v1038 = vsub.f32 %v976, 1.0
      %v1039 = vsub.f32 %v978, 1.0
      %v1040 = vsub.f32 %v980, 1.0
      %v1041 = vsub.f32 %v982, 1.0
      %v1042 = vsub.f32 %v984, 1.0
      %v1043 = vsub.f32 %v986, 1.0
      %v1044 = vsub.f32 %v988, 1.0
      %v1045 = vsub.f32 %v990, 1.0
      %v1046 = vsub.f32 %v992, 1.0
      %v1047 = vsub.f32 %v994, 1.0
      %v1048 = vsub.f32 %v996, 1.0
      %v1049 = vsub.f32 %v998, 1.0
      %v1050 = vsub.f32 %v1000, 1.0
      %v1051 = vsub.f32 %v1002, 1.0
      %v1052 = vsub.f32 %v1004, 1.0
      %v1053 = vsub.f32 %v1006, 1.0
      %v1054 = vsub.f32 %v1008, 1.0
      %v1055 = vsub.f32 %v1010, 1.0
      %v1056 = vsub.f32 %v1012, 1.0
      %v1057 = vsub.f32 %v1014, 1.0
      %v1058 = vsub.f32 %v1016, 1.0
      %v1059 = vsub.f32 %v1018, 1.0
      %v1060 = vsub.f32 %v1020, 1.0
      %v1061 = vsub.f32 %v1022, 1.0
      %v1062 = vsub.f32 %v1024, 1.0
      %v1063 = vsub.f32 %v1026, 1.0
      %v1064 = vsub.f32 %v1028, 1.0
      %v1065 = vsub.f32 %v1030, 1.0
      %v1066 = vsub.f32 %v1032, 1.0
      %v1067 = vsub.f32 %v1034, 1.0
      %v1068 = vsub.f32 %v1036, 1.0
      %v1069 = vmul.f32 %v1037, 1.6732632
      %v1070 = vmul.f32 %v1038, 1.6732632
      %v1071 = vmul.f32 %v1039, 1.6732632
      %v1072 = vmul.f32 %v1040, 1.6732632
      %v1073 = vmul.f32 %v1041, 1.6732632
      %v1074 = vmul.f32 %v1042, 1.6732632
      %v1075 = vmul.f32 %v1043, 1.6732632
      %v1076 = vmul.f32 %v1044, 1.6732632
      %v1077 = vmul.f32 %v1045, 1.6732632
      %v1078 = vmul.f32 %v1046, 1.6732632
      %v1079 = vmul.f32 %v1047, 1.6732632
      %v1080 = vmul.f32 %v1048, 1.6732632
      %v1081 = vmul.f32 %v1049, 1.6732632
      %v1082 = vmul.f32 %v1050, 1.6732632
      %v1083 = vmul.f32 %v1051, 1.6732632
      %v1084 = vmul.f32 %v1052, 1.6732632
      %v1085 = vmul.f32 %v1053, 1.6732632
      %v1086 = vmul.f32 %v1054, 1.6732632
      %v1087 = vmul.f32 %v1055, 1.6732632
      %v1088 = vmul.f32 %v1056, 1.6732632
      %v1089 = vmul.f32 %v1057, 1.6732632
      %v1090 = vmul.f32 %v1058, 1.6732632
      %v1091 = vmul.f32 %v1059, 1.6732632
      %v1092 = vmul.f32 %v1060, 1.6732632
      %v1093 = vmul.f32 %v1061, 1.6732632
      %v1094 = vmul.f32 %v1062, 1.6732632
      %v1095 = vmul.f32 %v1063, 1.6732632
      %v1096 = vmul.f32 %v1064, 1.6732632
      %v1097 = vmul.f32 %v1065, 1.6732632
      %v1098 = vmul.f32 %v1066, 1.6732632
      %v1099 = vmul.f32 %v1067, 1.6732632
      %v1100 = vmul.f32 %v1068, 1.6732632
      %vm1101 = vcmp.gt.f32.partialorder %v863, 0.0
      %vm1102 = vcmp.gt.f32.partialorder %v865, 0.0
      %vm1103 = vcmp.gt.f32.partialorder %v867, 0.0
      %vm1104 = vcmp.gt.f32.partialorder %v869, 0.0
      %vm1105 = vcmp.gt.f32.partialorder %v873, 0.0
      %vm1106 = vcmp.gt.f32.partialorder %v875, 0.0
      %vm1107 = vcmp.gt.f32.partialorder %v877, 0.0
      %vm1108 = vcmp.gt.f32.partialorder %v879, 0.0
      %vm1109 = vcmp.gt.f32.partialorder %v883, 0.0
      %vm1110 = vcmp.gt.f32.partialorder %v885, 0.0
      %vm1111 = vcmp.gt.f32.partialorder %v887, 0.0
      %vm1112 = vcmp.gt.f32.partialorder %v889, 0.0
      %vm1113 = vcmp.gt.f32.partialorder %v893, 0.0
      %vm1114 = vcmp.gt.f32.partialorder %v895, 0.0
      %vm1115 = vcmp.gt.f32.partialorder %v897, 0.0
      %vm1116 = vcmp.gt.f32.partialorder %v899, 0.0
      %vm1117 = vcmp.gt.f32.partialorder %v903, 0.0
      %vm1118 = vcmp.gt.f32.partialorder %v905, 0.0
      %vm1119 = vcmp.gt.f32.partialorder %v907, 0.0
      %vm1120 = vcmp.gt.f32.partialorder %v909, 0.0
      %vm1121 = vcmp.gt.f32.partialorder %v913, 0.0
      %vm1122 = vcmp.gt.f32.partialorder %v915, 0.0
      %vm1123 = vcmp.gt.f32.partialorder %v917, 0.0
      %vm1124 = vcmp.gt.f32.partialorder %v919, 0.0
      %vm1125 = vcmp.gt.f32.partialorder %v923, 0.0
      %vm1126 = vcmp.gt.f32.partialorder %v925, 0.0
      %vm1127 = vcmp.gt.f32.partialorder %v927, 0.0
      %vm1128 = vcmp.gt.f32.partialorder %v929, 0.0
      %vm1129 = vcmp.gt.f32.partialorder %v933, 0.0
      %vm1130 = vcmp.gt.f32.partialorder %v935, 0.0
      %vm1131 = vcmp.gt.f32.partialorder %v937, 0.0
      %vm1132 = vcmp.gt.f32.partialorder %v939, 0.0
      %v1133 = vsel %vm1101, %v863, %v1069
      %v1134 = vsel %vm1102, %v865, %v1070
      %v1135 = vsel %vm1103, %v867, %v1071
      %v1136 = vsel %vm1104, %v869, %v1072
      %v1137 = vsel %vm1105, %v873, %v1073
      %v1138 = vsel %vm1106, %v875, %v1074
      %v1139 = vsel %vm1107, %v877, %v1075
      %v1140 = vsel %vm1108, %v879, %v1076
      %v1141 = vsel %vm1109, %v883, %v1077
      %v1142 = vsel %vm1110, %v885, %v1078
      %v1143 = vsel %vm1111, %v887, %v1079
      %v1144 = vsel %vm1112, %v889, %v1080
      %v1145 = vsel %vm1113, %v893, %v1081
      %v1146 = vsel %vm1114, %v895, %v1082
      %v1147 = vsel %vm1115, %v897, %v1083
      %v1148 = vsel %vm1116, %v899, %v1084
      %v1149 = vsel %vm1117, %v903, %v1085
      %v1150 = vsel %vm1118, %v905, %v1086
      %v1151 = vsel %vm1119, %v907, %v1087
      %v1152 = vsel %vm1120, %v909, %v1088
      %v1153 = vsel %vm1121, %v913, %v1089
      %v1154 = vsel %vm1122, %v915, %v1090
      %v1155 = vsel %vm1123, %v917, %v1091
      %v1156 = vsel %vm1124, %v919, %v1092
      %v1157 = vsel %vm1125, %v923, %v1093
      %v1158 = vsel %vm1126, %v925, %v1094
      %v1159 = vsel %vm1127, %v927, %v1095
      %v1160 = vsel %vm1128, %v929, %v1096
      %v1161 = vsel %vm1129, %v933, %v1097
      %v1162 = vsel %vm1130, %v935, %v1098
      %v1163 = vsel %vm1131, %v937, %v1099
      %v1164 = vsel %vm1132, %v939, %v1100
      %v1165 = vmul.f32 %v1133, 1.050701
      %v1166 = vmul.f32 %v1134, 1.050701
      %v1167 = vmul.f32 %v1135, 1.050701
      %v1168 = vmul.f32 %v1136, 1.050701
      %v1169 = vmul.f32 %v1137, 1.050701
      %v1170 = vmul.f32 %v1138, 1.050701
      %v1171 = vmul.f32 %v1139, 1.050701
      %v1172 = vmul.f32 %v1140, 1.050701
      %v1173 = vmul.f32 %v1141, 1.050701
      %v1174 = vmul.f32 %v1142, 1.050701
      %v1175 = vmul.f32 %v1143, 1.050701
      %v1176 = vmul.f32 %v1144, 1.050701
      %v1177 = vmul.f32 %v1145, 1.050701
      %v1178 = vmul.f32 %v1146, 1.050701
      %v1179 = vmul.f32 %v1147, 1.050701
      %v1180 = vmul.f32 %v1148, 1.050701
      %v1181 = vmul.f32 %v1149, 1.050701
      %v1182 = vmul.f32 %v1150, 1.050701
      %v1183 = vmul.f32 %v1151, 1.050701
      %v1184 = vmul.f32 %v1152, 1.050701
      %v1185 = vmul.f32 %v1153, 1.050701
      %v1186 = vmul.f32 %v1154, 1.050701
      %v1187 = vmul.f32 %v1155, 1.050701
      %v1188 = vmul.f32 %v1156, 1.050701
      %v1189 = vmul.f32 %v1157, 1.050701
      %v1190 = vmul.f32 %v1158, 1.050701
      %v1191 = vmul.f32 %v1159, 1.050701
      %v1192 = vmul.f32 %v1160, 1.050701
      %v1193 = vmul.f32 %v1161, 1.050701
      %v1194 = vmul.f32 %v1162, 1.050701
      %v1195 = vmul.f32 %v1163, 1.050701
      %v1196 = vmul.f32 %v1164, 1.050701
      %v1197 = vadd.f32 %v1165, %v1166
      %1198 = vadd.xlane.f32.xlu0 %v1197
      %v1199 = vpop.xlane.xlu0 %1198
      %v1200 = vadd.f32 %v1167, %v1168
      %1201 = vadd.xlane.f32.xlu0 %v1200
      %v1202 = vpop.xlane.xlu0 %1201
      %v1203 = vadd.f32 %v1169, %v1170
      %1204 = vadd.xlane.f32.xlu0 %v1203
      %v1205 = vpop.xlane.xlu0 %1204
      %v1206 = vadd.f32 %v1171, %v1172
      %1207 = vadd.xlane.f32.xlu0 %v1206
      %v1208 = vpop.xlane.xlu0 %1207
      %v1209 = vadd.f32 %v1173, %v1174
      %1210 = vadd.xlane.f32.xlu0 %v1209
      %v1211 = vpop.xlane.xlu0 %1210
      %v1212 = vadd.f32 %v1175, %v1176
      %1213 = vadd.xlane.f32.xlu0 %v1212
      %v1214 = vpop.xlane.xlu0 %1213
      %v1215 = vadd.f32 %v1177, %v1178
      %1216 = vadd.xlane.f32.xlu0 %v1215
      %v1217 = vpop.xlane.xlu0 %1216
      %v1218 = vadd.f32 %v1179, %v1180
      %1219 = vadd.xlane.f32.xlu0 %v1218
      %v1220 = vpop.xlane.xlu0 %1219
      %v1221 = vadd.f32 %v1181, %v1182
      %1222 = vadd.xlane.f32.xlu0 %v1221
      %v1223 = vpop.xlane.xlu0 %1222
      %v1224 = vadd.f32 %v1183, %v1184
      %1225 = vadd.xlane.f32.xlu0 %v1224
      %v1226 = vpop.xlane.xlu0 %1225
      %v1227 = vadd.f32 %v1185, %v1186
      %1228 = vadd.xlane.f32.xlu0 %v1227
      %v1229 = vpop.xlane.xlu0 %1228
      %v1230 = vadd.f32 %v1187, %v1188
      %1231 = vadd.xlane.f32.xlu0 %v1230
      %v1232 = vpop.xlane.xlu0 %1231
      %v1233 = vadd.f32 %v1189, %v1190
      %1234 = vadd.xlane.f32.xlu0 %v1233
      %v1235 = vpop.xlane.xlu0 %1234
      %v1236 = vadd.f32 %v1191, %v1192
      %1237 = vadd.xlane.f32.xlu0 %v1236
      %v1238 = vpop.xlane.xlu0 %1237
      %v1239 = vadd.f32 %v1193, %v1194
      %1240 = vadd.xlane.f32.xlu0 %v1239
      %v1241 = vpop.xlane.xlu0 %1240
      %v1242 = vadd.f32 %v1195, %v1196
      %1243 = vadd.xlane.f32.xlu0 %v1242
      %v1244 = vpop.xlane.xlu0 %1243
      %v1245 = vadd.f32 %v1199, %v1202
      %v1246 = vadd.f32 %v1245, %v1205
      %v1247 = vadd.f32 %v1246, %v1208
      %v1248 = vadd.f32 %v1247, %v1211
      %v1249 = vadd.f32 %v1248, %v1214
      %v1250 = vadd.f32 %v1249, %v1217
      %v1251 = vadd.f32 %v1250, %v1220
      %v1252 = vadd.f32 %v1251, %v1223
      %v1253 = vadd.f32 %v1252, %v1226
      %v1254 = vadd.f32 %v1253, %v1229
      %v1255 = vadd.f32 %v1254, %v1232
      %v1256 = vadd.f32 %v1255, %v1235
      %v1257 = vadd.f32 %v1256, %v1238
      %v1258 = vadd.f32 %v1257, %v1241
      %v1259 = vadd.f32 %v1258, %v1244
      %v1260 = vrot.slane %v1259, 4
      %v1261 = vadd.f32 %v1259, %v1260
      %v1262 = vrot.slane %v1261, 2
      %v1263 = vadd.f32 %v1261, %v1262
      %v1264 = vrot.slane %v1263, 1
      %v1265 = vadd.f32 %v1263, %v1264
      %v1266 = vmul.f32 %v1265, 3.0517578e-05
      %v1267 = vsub.f32 %v1165, %v1266
      %v1268 = vsub.f32 %v1166, %v1266
      %v1269 = vsub.f32 %v1167, %v1266
      %v1270 = vsub.f32 %v1168, %v1266
      %v1271 = vsub.f32 %v1169, %v1266
      %v1272 = vsub.f32 %v1170, %v1266
      %v1273 = vsub.f32 %v1171, %v1266
      %v1274 = vsub.f32 %v1172, %v1266
      %v1275 = vsub.f32 %v1173, %v1266
      %v1276 = vsub.f32 %v1174, %v1266
      %v1277 = vsub.f32 %v1175, %v1266
      %v1278 = vsub.f32 %v1176, %v1266
      %v1279 = vsub.f32 %v1177, %v1266
      %v1280 = vsub.f32 %v1178, %v1266
      %v1281 = vsub.f32 %v1179, %v1266
      %v1282 = vsub.f32 %v1180, %v1266
      %v1283 = vsub.f32 %v1181, %v1266
      %v1284 = vsub.f32 %v1182, %v1266
      %v1285 = vsub.f32 %v1183, %v1266
      %v1286 = vsub.f32 %v1184, %v1266
      %v1287 = vsub.f32 %v1185, %v1266
      %v1288 = vsub.f32 %v1186, %v1266
      %v1289 = vsub.f32 %v1187, %v1266
      %v1290 = vsub.f32 %v1188, %v1266
      %v1291 = vsub.f32 %v1189, %v1266
      %v1292 = vsub.f32 %v1190, %v1266
      %v1293 = vsub.f32 %v1191, %v1266
      %v1294 = vsub.f32 %v1192, %v1266
      %v1295 = vsub.f32 %v1193, %v1266
      %v1296 = vsub.f32 %v1194, %v1266
      %v1297 = vsub.f32 %v1195, %v1266
      %v1298 = vsub.f32 %v1196, %v1266
      %v1299 = vmul.f32 %v1267, %v1267
      %v1300 = vmul.f32 %v1268, %v1268
      %v1301 = vmul.f32 %v1269, %v1269
      %v1302 = vmul.f32 %v1270, %v1270
      %v1303 = vmul.f32 %v1271, %v1271
      %v1304 = vmul.f32 %v1272, %v1272
      %v1305 = vmul.f32 %v1273, %v1273
      %v1306 = vmul.f32 %v1274, %v1274
      %v1307 = vmul.f32 %v1275, %v1275
      %v1308 = vmul.f32 %v1276, %v1276
      %v1309 = vmul.f32 %v1277, %v1277
      %v1310 = vmul.f32 %v1278, %v1278
      %v1311 = vmul.f32 %v1279, %v1279
      %v1312 = vmul.f32 %v1280, %v1280
      %v1313 = vmul.f32 %v1281, %v1281
      %v1314 = vmul.f32 %v1282, %v1282
      %v1315 = vmul.f32 %v1283, %v1283
      %v1316 = vmul.f32 %v1284, %v1284
      %v1317 = vmul.f32 %v1285, %v1285
      %v1318 = vmul.f32 %v1286, %v1286
      %v1319 = vmul.f32 %v1287, %v1287
      %v1320 = vmul.f32 %v1288, %v1288
      %v1321 = vmul.f32 %v1289, %v1289
      %v1322 = vmul.f32 %v1290, %v1290
      %v1323 = vmul.f32 %v1291, %v1291
      %v1324 = vmul.f32 %v1292, %v1292
      %v1325 = vmul.f32 %v1293, %v1293
      %v1326 = vmul.f32 %v1294, %v1294
      %v1327 = vmul.f32 %v1295, %v1295
      %v1328 = vmul.f32 %v1296, %v1296
      %v1329 = vmul.f32 %v1297, %v1297
      %v1330 = vmul.f32 %v1298, %v1298
      %v1331 = vadd.f32 %v1299, %v1300
      %1332 = vadd.xlane.f32.xlu0 %v1331
      %v1333 = vpop.xlane.xlu0 %1332
      %v1334 = vadd.f32 %v1301, %v1302
      %1335 = vadd.xlane.f32.xlu0 %v1334
      %v1336 = vpop.xlane.xlu0 %1335
      %v1337 = vadd.f32 %v1303, %v1304
      %1338 = vadd.xlane.f32.xlu0 %v1337
      %v1339 = vpop.xlane.xlu0 %1338
      %v1340 = vadd.f32 %v1305, %v1306
      %1341 = vadd.xlane.f32.xlu0 %v1340
      %v1342 = vpop.xlane.xlu0 %1341
      %v1343 = vadd.f32 %v1307, %v1308
      %1344 = vadd.xlane.f32.xlu0 %v1343
      %v1345 = vpop.xlane.xlu0 %1344
      %v1346 = vadd.f32 %v1309, %v1310
      %1347 = vadd.xlane.f32.xlu0 %v1346
      %v1348 = vpop.xlane.xlu0 %1347
      %v1349 = vadd.f32 %v1311, %v1312
      %1350 = vadd.xlane.f32.xlu0 %v1349
      %v1351 = vpop.xlane.xlu0 %1350
      %v1352 = vadd.f32 %v1313, %v1314
      %1353 = vadd.xlane.f32.xlu0 %v1352
      %v1354 = vpop.xlane.xlu0 %1353
      %v1355 = vadd.f32 %v1315, %v1316
      %1356 = vadd.xlane.f32.xlu0 %v1355
      %v1357 = vpop.xlane.xlu0 %1356
      %v1358 = vadd.f32 %v1317, %v1318
      %1359 = vadd.xlane.f32.xlu0 %v1358
      %v1360 = vpop.xlane.xlu0 %1359
      %v1361 = vadd.f32 %v1319, %v1320
      %1362 = vadd.xlane.f32.xlu0 %v1361
      %v1363 = vpop.xlane.xlu0 %1362
      %v1364 = vadd.f32 %v1321, %v1322
      %1365 = vadd.xlane.f32.xlu0 %v1364
      %v1366 = vpop.xlane.xlu0 %1365
      %v1367 = vadd.f32 %v1323, %v1324
      %1368 = vadd.xlane.f32.xlu0 %v1367
      %v1369 = vpop.xlane.xlu0 %1368
      %v1370 = vadd.f32 %v1325, %v1326
      %1371 = vadd.xlane.f32.xlu0 %v1370
      %v1372 = vpop.xlane.xlu0 %1371
      %v1373 = vadd.f32 %v1327, %v1328
      %1374 = vadd.xlane.f32.xlu0 %v1373
      %v1375 = vpop.xlane.xlu0 %1374
      %v1376 = vadd.f32 %v1329, %v1330
      %1377 = vadd.xlane.f32.xlu0 %v1376
      %v1378 = vpop.xlane.xlu0 %1377
      %v1379 = vadd.f32 %v1333, %v1336
      %v1380 = vadd.f32 %v1379, %v1339
      %v1381 = vadd.f32 %v1380, %v1342
      %v1382 = vadd.f32 %v1381, %v1345
      %v1383 = vadd.f32 %v1382, %v1348
      %v1384 = vadd.f32 %v1383, %v1351
      %v1385 = vadd.f32 %v1384, %v1354
      %v1386 = vadd.f32 %v1385, %v1357
      %v1387 = vadd.f32 %v1386, %v1360
      %v1388 = vadd.f32 %v1387, %v1363
      %v1389 = vadd.f32 %v1388, %v1366
      %v1390 = vadd.f32 %v1389, %v1369
      %v1391 = vadd.f32 %v1390, %v1372
      %v1392 = vadd.f32 %v1391, %v1375
      %v1393 = vadd.f32 %v1392, %v1378
      %v1394 = vrot.slane %v1393, 4
      %v1395 = vadd.f32 %v1393, %v1394
      %v1396 = vrot.slane %v1395, 2
      %v1397 = vadd.f32 %v1395, %v1396
      %v1398 = vrot.slane %v1397, 1
      %v1399 = vadd.f32 %v1397, %v1398
      %v1400 = vmul.f32 %v1399, 3.0517578e-05
      %v1401 = vadd.f32 %v1400, 1e-05
      %v1402 = vrsqrt.pop %v1401
      %v1403 = vmul.f32 %v1267, %v1402
      %v1404 = vmul.f32 %v1268, %v1402
      %v1405 = vmul.f32 %v1269, %v1402
      %v1406 = vmul.f32 %v1270, %v1402
      %v1407 = vmul.f32 %v1271, %v1402
      %v1408 = vmul.f32 %v1272, %v1402
      %v1409 = vmul.f32 %v1273, %v1402
      %v1410 = vmul.f32 %v1274, %v1402
      %v1411 = vmul.f32 %v1275, %v1402
      %v1412 = vmul.f32 %v1276, %v1402
      %v1413 = vmul.f32 %v1277, %v1402
      %v1414 = vmul.f32 %v1278, %v1402
      %v1415 = vmul.f32 %v1279, %v1402
      %v1416 = vmul.f32 %v1280, %v1402
      %v1417 = vmul.f32 %v1281, %v1402
      %v1418 = vmul.f32 %v1282, %v1402
      %v1419 = vmul.f32 %v1283, %v1402
      %v1420 = vmul.f32 %v1284, %v1402
      %v1421 = vmul.f32 %v1285, %v1402
      %v1422 = vmul.f32 %v1286, %v1402
      %v1423 = vmul.f32 %v1287, %v1402
      %v1424 = vmul.f32 %v1288, %v1402
      %v1425 = vmul.f32 %v1289, %v1402
      %v1426 = vmul.f32 %v1290, %v1402
      %v1427 = vmul.f32 %v1291, %v1402
      %v1428 = vmul.f32 %v1292, %v1402
      %v1429 = vmul.f32 %v1293, %v1402
      %v1430 = vmul.f32 %v1294, %v1402
      %v1431 = vmul.f32 %v1295, %v1402
      %v1432 = vmul.f32 %v1296, %v1402
      %v1433 = vmul.f32 %v1297, %v1402
      %v1434 = vmul.f32 %v1298, %v1402
      %v1435 = vld [vmem:[%s3] sm:$0xff]
      %v1436 = vld [vmem:[%s3 + $0x8] sm:$0xff]
      %v1437 = vld [vmem:[%s3 + $0x10] sm:$0xff]
      %v1438 = vld [vmem:[%s3 + $0x18] sm:$0xff]
      %v1439 = vld [vmem:[%s3 + $0x20] sm:$0xff]
      %v1440 = vld [vmem:[%s3 + $0x28] sm:$0xff]
      %v1441 = vld [vmem:[%s3 + $0x30] sm:$0xff]
      %v1442 = vld [vmem:[%s3 + $0x38] sm:$0xff]
      %v1443 = vld [vmem:[%s3 + $0x40] sm:$0xff]
      %v1444 = vld [vmem:[%s3 + $0x48] sm:$0xff]
      %v1445 = vld [vmem:[%s3 + $0x50] sm:$0xff]
      %v1446 = vld [vmem:[%s3 + $0x58] sm:$0xff]
      %v1447 = vld [vmem:[%s3 + $0x60] sm:$0xff]
      %v1448 = vld [vmem:[%s3 + $0x68] sm:$0xff]
      %v1449 = vld [vmem:[%s3 + $0x70] sm:$0xff]
      %v1450 = vld [vmem:[%s3 + $0x78] sm:$0xff]
      %v1451 = vld [vmem:[%s3 + $0x80] sm:$0xff]
      %v1452 = vld [vmem:[%s3 + $0x88] sm:$0xff]
      %v1453 = vld [vmem:[%s3 + $0x90] sm:$0xff]
      %v1454 = vld [vmem:[%s3 + $0x98] sm:$0xff]
      %v1455 = vld [vmem:[%s3 + $0xa0] sm:$0xff]
      %v1456 = vld [vmem:[%s3 + $0xa8] sm:$0xff]
      %v1457 = vld [vmem:[%s3 + $0xb0] sm:$0xff]
      %v1458 = vld [vmem:[%s3 + $0xb8] sm:$0xff]
      %v1459 = vld [vmem:[%s3 + $0xc0] sm:$0xff]
      %v1460 = vld [vmem:[%s3 + $0xc8] sm:$0xff]
      %v1461 = vld [vmem:[%s3 + $0xd0] sm:$0xff]
      %v1462 = vld [vmem:[%s3 + $0xd8] sm:$0xff]
      %v1463 = vld [vmem:[%s3 + $0xe0] sm:$0xff]
      %v1464 = vld [vmem:[%s3 + $0xe8] sm:$0xff]
      %v1465 = vld [vmem:[%s3 + $0xf0] sm:$0xff]
      %v1466 = vld [vmem:[%s3 + $0xf8] sm:$0xff]
      %v1467 = vmul.f32 %v1403, %v1435
      %v1468 = vmul.f32 %v1404, %v1436
      %v1469 = vmul.f32 %v1405, %v1437
      %v1470 = vmul.f32 %v1406, %v1438
      %v1471 = vmul.f32 %v1407, %v1439
      %v1472 = vmul.f32 %v1408, %v1440
      %v1473 = vmul.f32 %v1409, %v1441
      %v1474 = vmul.f32 %v1410, %v1442
      %v1475 = vmul.f32 %v1411, %v1443
      %v1476 = vmul.f32 %v1412, %v1444
      %v1477 = vmul.f32 %v1413, %v1445
      %v1478 = vmul.f32 %v1414, %v1446
      %v1479 = vmul.f32 %v1415, %v1447
      %v1480 = vmul.f32 %v1416, %v1448
      %v1481 = vmul.f32 %v1417, %v1449
      %v1482 = vmul.f32 %v1418, %v1450
      %v1483 = vmul.f32 %v1419, %v1451
      %v1484 = vmul.f32 %v1420, %v1452
      %v1485 = vmul.f32 %v1421, %v1453
      %v1486 = vmul.f32 %v1422, %v1454
      %v1487 = vmul.f32 %v1423, %v1455
      %v1488 = vmul.f32 %v1424, %v1456
      %v1489 = vmul.f32 %v1425, %v1457
      %v1490 = vmul.f32 %v1426, %v1458
      %v1491 = vmul.f32 %v1427, %v1459
      %v1492 = vmul.f32 %v1428, %v1460
      %v1493 = vmul.f32 %v1429, %v1461
      %v1494 = vmul.f32 %v1430, %v1462
      %v1495 = vmul.f32 %v1431, %v1463
      %v1496 = vmul.f32 %v1432, %v1464
      %v1497 = vmul.f32 %v1433, %v1465
      %v1498 = vmul.f32 %v1434, %v1466
      %v1499 = vld [vmem:[%s4] sm:$0xff]
      %v1500 = vld [vmem:[%s4 + $0x8] sm:$0xff]
      %v1501 = vld [vmem:[%s4 + $0x10] sm:$0xff]
      %v1502 = vld [vmem:[%s4 + $0x18] sm:$0xff]
      %v1503 = vld [vmem:[%s4 + $0x20] sm:$0xff]
      %v1504 = vld [vmem:[%s4 + $0x28] sm:$0xff]
      %v1505 = vld [vmem:[%s4 + $0x30] sm:$0xff]
      %v1506 = vld [vmem:[%s4 + $0x38] sm:$0xff]
      %v1507 = vld [vmem:[%s4 + $0x40] sm:$0xff]
      %v1508 = vld [vmem:[%s4 + $0x48] sm:$0xff]
      %v1509 = vld [vmem:[%s4 + $0x50] sm:$0xff]
      %v1510 = vld [vmem:[%s4 + $0x58] sm:$0xff]
      %v1511 = vld [vmem:[%s4 + $0x60] sm:$0xff]
      %v1512 = vld [vmem:[%s4 + $0x68] sm:$0xff]
      %v1513 = vld [vmem:[%s4 + $0x70] sm:$0xff]
      %v1514 = vld [vmem:[%s4 + $0x78] sm:$0xff]
      %v1515 = vld [vmem:[%s4 + $0x80] sm:$0xff]
      %v1516 = vld [vmem:[%s4 + $0x88] sm:$0xff]
      %v1517 = vld [vmem:[%s4 + $0x90] sm:$0xff]
      %v1518 = vld [vmem:[%s4 + $0x98] sm:$0xff]
      %v1519 = vld [vmem:[%s4 + $0xa0] sm:$0xff]
      %v1520 = vld [vmem:[%s4 + $0xa8] sm:$0xff]
      %v1521 = vld [vmem:[%s4 + $0xb0] sm:$0xff]
      %v1522 = vld [vmem:[%s4 + $0xb8] sm:$0xff]
      %v1523 = vld [vmem:[%s4 + $0xc0] sm:$0xff]
      %v1524 = vld [vmem:[%s4 + $0xc8] sm:$0xff]
      %v1525 = vld [vmem:[%s4 + $0xd0] sm:$0xff]
      %v1526 = vld [vmem:[%s4 + $0xd8] sm:$0xff]
      %v1527 = vld [vmem:[%s4 + $0xe0] sm:$0xff]
      %v1528 = vld [vmem:[%s4 + $0xe8] sm:$0xff]
      %v1529 = vld [vmem:[%s4 + $0xf0] sm:$0xff]
      %v1530 = vld [vmem:[%s4 + $0xf8] sm:$0xff]
      %v1531 = vadd.f32 %v1467, %v1499
      %v1532 = vadd.f32 %v1468, %v1500
      %v1533 = vadd.f32 %v1469, %v1501
      %v1534 = vadd.f32 %v1470, %v1502
      %v1535 = vadd.f32 %v1471, %v1503
      %v1536 = vadd.f32 %v1472, %v1504
      %v1537 = vadd.f32 %v1473, %v1505
      %v1538 = vadd.f32 %v1474, %v1506
      %v1539 = vadd.f32 %v1475, %v1507
      %v1540 = vadd.f32 %v1476, %v1508
      %v1541 = vadd.f32 %v1477, %v1509
      %v1542 = vadd.f32 %v1478, %v1510
      %v1543 = vadd.f32 %v1479, %v1511
      %v1544 = vadd.f32 %v1480, %v1512
      %v1545 = vadd.f32 %v1481, %v1513
      %v1546 = vadd.f32 %v1482, %v1514
      %v1547 = vadd.f32 %v1483, %v1515
      %v1548 = vadd.f32 %v1484, %v1516
      %v1549 = vadd.f32 %v1485, %v1517
      %v1550 = vadd.f32 %v1486, %v1518
      %v1551 = vadd.f32 %v1487, %v1519
      %v1552 = vadd.f32 %v1488, %v1520
      %v1553 = vadd.f32 %v1489, %v1521
      %v1554 = vadd.f32 %v1490, %v1522
      %v1555 = vadd.f32 %v1491, %v1523
      %v1556 = vadd.f32 %v1492, %v1524
      %v1557 = vadd.f32 %v1493, %v1525
      %v1558 = vadd.f32 %v1494, %v1526
      %v1559 = vadd.f32 %v1495, %v1527
      %v1560 = vadd.f32 %v1496, %v1528
      %v1561 = vadd.f32 %v1497, %v1529
      %v1562 = vadd.f32 %v1498, %v1530
      %1563 = vst [vmem:[%s224] sm:$0xff] %v1531
      %1564 = vst [vmem:[%s224 + $0x8] sm:$0xff] %v1532
      %1565 = vst [vmem:[%s224 + $0x10] sm:$0xff] %v1533
      %1566 = vst [vmem:[%s224 + $0x18] sm:$0xff] %v1534
      %1567 = vst [vmem:[%s224 + $0x20] sm:$0xff] %v1535
      %1568 = vst [vmem:[%s224 + $0x28] sm:$0xff] %v1536
      %1569 = vst [vmem:[%s224 + $0x30] sm:$0xff] %v1537
      %1570 = vst [vmem:[%s224 + $0x38] sm:$0xff] %v1538
      %1571 = vst [vmem:[%s224 + $0x40] sm:$0xff] %v1539
      %1572 = vst [vmem:[%s224 + $0x48] sm:$0xff] %v1540
      %1573 = vst [vmem:[%s224 + $0x50] sm:$0xff] %v1541
      %1574 = vst [vmem:[%s224 + $0x58] sm:$0xff] %v1542
      %1575 = vst [vmem:[%s224 + $0x60] sm:$0xff] %v1543
      %1576 = vst [vmem:[%s224 + $0x68] sm:$0xff] %v1544
      %1577 = vst [vmem:[%s224 + $0x70] sm:$0xff] %v1545
      %1578 = vst [vmem:[%s224 + $0x78] sm:$0xff] %v1546
      %1579 = vst [vmem:[%s224 + $0x80] sm:$0xff] %v1547
      %1580 = vst [vmem:[%s224 + $0x88] sm:$0xff] %v1548
      %1581 = vst [vmem:[%s224 + $0x90] sm:$0xff] %v1549
      %1582 = vst [vmem:[%s224 + $0x98] sm:$0xff] %v1550
      %1583 = vst [vmem:[%s224 + $0xa0] sm:$0xff] %v1551
      %1584 = vst [vmem:[%s224 + $0xa8] sm:$0xff] %v1552
      %1585 = vst [vmem:[%s224 + $0xb0] sm:$0xff] %v1553
      %1586 = vst [vmem:[%s224 + $0xb8] sm:$0xff] %v1554
      %1587 = vst [vmem:[%s224 + $0xc0] sm:$0xff] %v1555
      %1588 = vst [vmem:[%s224 + $0xc8] sm:$0xff] %v1556
      %1589 = vst [vmem:[%s224 + $0xd0] sm:$0xff] %v1557
      %1590 = vst [vmem:[%s224 + $0xd8] sm:$0xff] %v1558
      %1591 = vst [vmem:[%s224 + $0xe0] sm:$0xff] %v1559
      %1592 = vst [vmem:[%s224 + $0xe8] sm:$0xff] %v1560
      %1593 = vst [vmem:[%s224 + $0xf0] sm:$0xff] %v1561
      %1594 = vst [vmem:[%s224 + $0xf8] sm:$0xff] %v1562
      %p1595 = scmp.lt.s32.totalorder %s16, 1
      %s1596 = scalar_select %p1595, %s16, 1
      %s1597 = smul.addr %s1596, 32
      %s1598 = smul.addr %s1597, 8
      %s1599 = scalar_lea.vmem %s5, %s1598
      // Predicated region
      $region41: #{primary_capsules_forward.1} parent=39 // pred_check
        %p1600 = pneg %p144
      $region42: #{primary_capsules_forward.1} parent=39 // pred_check_branch
        %1602 = sbr.rel (%p1600) target = $region44
      $region43: #{primary_capsules_forward.1} parent=39 // pred_region
        _
      $region44: #{primary_capsules_forward.1} parent=39 // pred_fallthru
        _
    $region40: #{primary_capsules_forward.1} parent=5 // pred_fallthru
      _
    %p1603 = scmp.le.s32.totalorder 2, %s11
    // Predicated region
    $region45: #{primary_capsules_forward.1} parent=5 // pred_check
      %p1604 = pneg %p1603
    $region46: #{primary_capsules_forward.1} parent=5 // pred_check_branch
      %1606 = sbr.rel (%p1604) target = $region48
    $region47: #{primary_capsules_forward.1} parent=5 // pred_region
      %s1607 = ssub.s32 %s11, 2
      // Predicated region
      $region49: #{primary_capsules_forward.1} parent=47 // pred_check
        %p1608 = pneg %p150
      $region50: #{primary_capsules_forward.1} parent=47 // pred_check_branch
        %1610 = sbr.rel (%p1608) target = $region52
      $region51: #{primary_capsules_forward.1} parent=47 // pred_region
        %p1611 = scmp.lt.s32.totalorder %s17, 1
        %s1612 = scalar_select %p1611, %s17, 1
        %s1613 = smul.addr %s1612, 32
        %s1614 = smul.addr %s1613, 8
        %s1615 = scalar_lea.vmem %s5, %s1614
      $region52: #{primary_capsules_forward.1} parent=47 // pred_fallthru
        _
    $region48: #{primary_capsules_forward.1} parent=5 // pred_fallthru
      _
  $region6: #{primary_capsules_forward.1} parent=0 // loop_footer
    %s15 = sadd.s32 1, %s11
  $region7: #{primary_capsules_forward.1} parent=0 // loop_footer_branch
    %10 = sbr.rel target = $region3
  $region8: #{primary_capsules_forward.1} parent=0 // loop_exit
    _

</llo_original>
